<compile_context>
chip_gen: v7x
topology: tpu7x:2x2x1
jax: 0.10.0
libtpu: 0.0.40
codegen_flags: <defaults>
</compile_context>

<pallas_src>
import numpy as np
import jax
import jax.numpy as jnp
from jax.experimental import pallas as pl
from jax.experimental.pallas import tpu as pltpu


HALO_ROWS = 8  # halo block row count (multiple of 8 so the BlockSpec tiles cleanly)


def _upsample_conv_kernel(m_ref, brow_ref, x_ref, halo_ref, o_ref):
    # m_ref   : VMEM (C, W+2, 4*C*W2) folded upsample+conv weights, lanes (k, co, ox)
    #           k: 0 = even-row tap on slab row t, 1 = even on t+1,
    #              2 = odd-row  tap on slab row t+1, 3 = odd on t+2
    # brow_ref: VMEM (1, C*W2)        bias replicated along ox, lanes (co, ox)
    # x_ref   : VMEM (C, TH, W+2)     padded original-resolution rows of this tile
    # halo_ref: VMEM (C, 8, W+2)      next 8 padded rows (only the first 2 are used)
    # o_ref   : VMEM (C, TH, 2*W2)    packed output: [co, t, py*W2 + ox] = out[co, 2t+py, ox]
    C, TH, _ = x_ref.shape
    K = brow_ref.shape[1]            # C * W2
    W2 = K // C

    # (C, TH+2, W+2) slab of padded original rows covering this tile + 2 halo rows.
    slab = jnp.concatenate([x_ref[...], halo_ref[:, 0:2, :]], axis=1)

    # One small matmul per input channel produces every (k, co, ox) contribution of
    # every slab row; accumulate over input channels in f32.
    r = None
    for ci in range(C):
        t = jax.lax.dot_general(slab[ci], m_ref[ci],
                                dimension_numbers=(((1,), (0,)), ((), ())),
                                preferred_element_type=jnp.float32)      # (TH+2, 4K)
        r = t if r is None else r + t

    bias = brow_ref[...]                                                 # (1, K)
    # Even output rows (2t): taps k=0 on slab row t, k=1 on row t+1.
    acc_e = r[0:TH, 0 * K:1 * K] + r[1:TH + 1, 1 * K:2 * K] + bias       # (TH, K)
    # Odd output rows (2t+1): taps k=2 on row t+1, k=3 on row t+2.
    acc_o = r[1:TH + 1, 2 * K:3 * K] + r[2:TH + 2, 3 * K:4 * K] + bias   # (TH, K)

    # Per output channel: pack the two row parities side by side on the lane axis.
    for co in range(C):
        o_ref[co] = jnp.concatenate(
            [acc_e[:, co * W2:(co + 1) * W2], acc_o[:, co * W2:(co + 1) * W2]],
            axis=-1).astype(o_ref.dtype)


def _pick_row_tile(H, C, W, budget_bytes=8 * 1024 * 1024):
    """Largest multiple-of-8 divisor of H whose per-step working set double-buffers
    comfortably even on v7x's 64 MiB VMEM."""
    W2 = 2 * W
    best = 8
    for th in range(8, H + 1, 8):
        if H % th:
            continue
        step = 4 * (C * th * (W + 2)               # main input block
                    + C * HALO_ROWS * (W + 2)      # halo block
                    + C * (W + 2) * 4 * C * W2     # folded weight matrices (resident)
                    + C * W2                       # bias row
                    + C * th * 2 * W2              # output block
                    + (th + 2) * 4 * C * W2        # in-kernel contribution slab
                    + 2 * th * C * W2)             # even/odd accumulators
        if 2 * step <= budget_bytes:
            best = th
    return best


def upsample_forward(x_nchw, w_oihw, bias, *, row_tile=None):
    """Nearest x2 upsample + 3x3 'same' conv (PyTorch Upsample.forward).

    x_nchw: (N, C, H, W), w_oihw: (C, C, 3, 3), bias: (C,) -> (N, C, 2H, 2W)
    """
    N, C, H, W = x_nchw.shape
    assert w_oihw.shape == (C, C, 3, 3) and bias.shape == (C,)
    assert H % 8 == 0, "kernel tiles output rows in multiples of 8 (H % 8 == 0)"
    H2, W2 = 2 * H, 2 * W
    K = C * W2

    th = row_tile if row_tile is not None else _pick_row_tile(H, C, W)
    assert th % 8 == 0 and H % th == 0
    R = H // th

    # Zero pad at ORIGINAL resolution only: 1 column each side, 1 row on top and
    # HALO_ROWS-1 rows at the bottom so the last tile's halo block stays in bounds.
    xp = jnp.pad(x_nchw, ((0, 0), (0, 0), (1, HALO_ROWS - 1), (1, 1)))   # (N,C,H+8,W+2)

    # 0/1 column selection: sel[dw, j, ox] = [ j == (ox+dw+1)//2 ], i.e.
    # (padded_row @ sel[dw])[ox] is the dw-th column tap of the x2-upsampled padded row.
    j = np.arange(W + 2)[:, None]
    ox = np.arange(W2)[None, :]
    sel = np.stack([(((ox + dw + 1) // 2) == j) for dw in range(3)]).astype(np.float32)

    # Vertical taps collapse per output-row parity:
    #   even rows: (w0) on padded row iy,   (w1+w2) on iy+1
    #   odd  rows: (w0+w1) on padded row iy+1, (w2) on iy+2
    w = w_oihw.astype(jnp.float32)
    v = jnp.stack([w[:, :, 0, :],
                   w[:, :, 1, :] + w[:, :, 2, :],
                   w[:, :, 0, :] + w[:, :, 1, :],
                   w[:, :, 2, :]], axis=0)                               # (4, C, C, 3)

    # Fold everything into per-input-channel matrices, lane layout (k, co, ox).
    mfold = jnp.einsum('kcid,djx->ijkcx', v, jnp.asarray(sel))           # (ci, j, k, co, ox)
    mfold = mfold.reshape(C, W + 2, 4 * K).astype(x_nchw.dtype)

    brow = jnp.repeat(bias.astype(jnp.float32), W2).reshape(1, K)        # lanes (co, ox)

    out_packed = pl.pallas_call(
        _upsample_conv_kernel,
        out_shape=jax.ShapeDtypeStruct((N, C, H, 2 * W2), x_nchw.dtype),
        grid_spec=pltpu.PrefetchScalarGridSpec(
            num_scalar_prefetch=0,
            grid=(N, R),
            in_specs=[
                pl.BlockSpec((C, W + 2, 4 * K), lambda n, r: (0, 0, 0)),   # folded weights
                pl.BlockSpec((1, K), lambda n, r: (0, 0)),                 # bias row
                pl.BlockSpec((None, C, th, W + 2),
                             lambda n, r: (n, 0, r, 0)),                   # main rows
                pl.BlockSpec((None, C, HALO_ROWS, W + 2),
                             lambda n, r: (n, 0, (r + 1) * (th // HALO_ROWS), 0)),  # halo
            ],
            out_specs=pl.BlockSpec((None, C, th, 2 * W2),
                                   lambda n, r: (n, 0, r, 0)),
        ),
        compiler_params=pltpu.CompilerParams(
            dimension_semantics=("parallel", "parallel"),
            vmem_limit_bytes=32 * 1024 * 1024),
    )(mfold, brow, xp, xp)

    # Free reshape: [n, c, iy, py*W2 + ox] -> [n, c, 2*iy + py, ox]   (contiguous)
    return out_packed.reshape(N, C, H2, W2)


def _reference(x_nchw, w_oihw, bias):
    N, C, H, W = x_nchw.shape
    x_up = jnp.repeat(jnp.repeat(x_nchw, 2, axis=2), 2, axis=3)
    out = jax.lax.conv_general_dilated(
        x_up, w_oihw, window_strides=(1, 1), padding="SAME",
        dimension_numbers=("NCHW", "OIHW", "NCHW"))
    return out + bias.reshape(1, C, 1, 1)


def _run_case(N, C, H, W, key, row_tile=None):
    kx, kw, kb = jax.random.split(key, 3)
    x = jax.random.normal(kx, (N, C, H, W), dtype=jnp.float32)
    fan_in = C * 3 * 3
    w = jax.random.uniform(kw, (C, C, 3, 3), jnp.float32,
                           minval=-1.0, maxval=1.0) / np.sqrt(fan_in)
    b = jax.random.uniform(kb, (C,), jnp.float32,
                           minval=-1.0, maxval=1.0) / np.sqrt(fan_in)

    out = jax.block_until_ready(upsample_forward(x, w, b, row_tile=row_tile))
    ref = jax.block_until_ready(_reference(x, w, b))

    assert out.shape == (N, C, 2 * H, 2 * W), out.shape
    assert jnp.allclose(out, ref, atol=1e-4, rtol=1e-4), "mismatch vs reference"


if __name__ == "__main__":
    key = jax.random.PRNGKey(0)
    k1, k2, k3 = jax.random.split(key, 3)
    _run_case(2, 4, 16, 16, k1)               # primary shape, auto row tile
    _run_case(2, 4, 16, 16, k2, row_tile=8)   # force 2 row tiles (halo path)
    _run_case(1, 3, 8, 12, k3)                # odd channel count / width
    print("KERNEL_OK")
</pallas_src>

<mosaic_0001>
module attributes {stable_mosaic.version = 11 : i64} {
  func.func @_upsample_conv_kernel(%arg0: i32, %arg1: i32, %arg2: memref<4x18x512xf32, #tpu.memory_space<vmem>>, %arg3: memref<1x128xf32, #tpu.memory_space<vmem>>, %arg4: memref<1x4x16x18xf32, #tpu.memory_space<vmem>>, %arg5: memref<1x4x8x18xf32, #tpu.memory_space<vmem>>, %arg6: memref<1x4x16x64xf32, #tpu.memory_space<vmem>>) attributes {dimension_semantics = [#tpu.dimension_semantics<parallel>, #tpu.dimension_semantics<parallel>], iteration_bounds = array<i64: 2, 1>, scalar_prefetch = 0 : i64, scratch_operands = 0 : i64, tpu.core_type = #tpu.core_type<tc>, window_params = [{pipeline_mode = #tpu.pipeline_mode<synchronous>, transform_indices = @transform_0, window_bounds = array<i64: 4, 18, 512>}, {pipeline_mode = #tpu.pipeline_mode<synchronous>, transform_indices = @transform_1, window_bounds = array<i64: 1, 128>}, {transform_indices = @transform_2, window_bounds = array<i64: 1, 4, 16, 18>}, {transform_indices = @transform_3, window_bounds = array<i64: 1, 4, 8, 18>}, {transform_indices = @transform_4, window_bounds = array<i64: 1, 4, 16, 64>}]} {
    %c0 = arith.constant 0 : index
    %c0_0 = arith.constant 0 : index
    %c0_1 = arith.constant 0 : index
    %c0_2 = arith.constant 0 : index
    %0 = vector.load %arg4[%c0, %c0_0, %c0_1, %c0_2] : memref<1x4x16x18xf32, #tpu.memory_space<vmem>>, vector<1x4x16x18xf32>
    %1 = vector.shape_cast %0 : vector<1x4x16x18xf32> to vector<4x16x18xf32>
    %c0_3 = arith.constant 0 : index
    %c0_4 = arith.constant 0 : index
    %c0_5 = arith.constant 0 : index
    %c0_6 = arith.constant 0 : index
    %2 = vector.load %arg5[%c0_3, %c0_4, %c0_5, %c0_6] : memref<1x4x8x18xf32, #tpu.memory_space<vmem>>, vector<1x4x2x18xf32>
    %3 = vector.shape_cast %2 : vector<1x4x2x18xf32> to vector<4x2x18xf32>
    %4 = tpu.concatenate %1, %3 in 1 : vector<4x16x18xf32>, vector<4x2x18xf32> -> vector<4x18x18xf32>
    %5 = vector.extract_strided_slice %4 {offsets = [0, 0, 0], sizes = [1, 18, 18], strides = [1, 1, 1]} : vector<4x18x18xf32> to vector<1x18x18xf32>
    %6 = vector.shape_cast %5 : vector<1x18x18xf32> to vector<18x18xf32>
    %c0_7 = arith.constant 0 : index
    %c0_8 = arith.constant 0 : index
    %c0_9 = arith.constant 0 : index
    %7 = vector.load %arg2[%c0_7, %c0_8, %c0_9] : memref<4x18x512xf32, #tpu.memory_space<vmem>>, vector<1x18x512xf32>
    %8 = vector.shape_cast %7 : vector<1x18x512xf32> to vector<18x512xf32>
    %cst = arith.constant dense<0.000000e+00> : vector<18x512xf32>
    %9 = tpu.matmul %6, %8, %cst {dimension_numbers = #tpu.dot_dimension_numbers<[1], [0], [0], [1], [0, 0, 1, 1], [], []>} : vector<18x18xf32>, vector<18x512xf32>, vector<18x512xf32> -> vector<18x512xf32>
    %10 = vector.extract_strided_slice %4 {offsets = [1, 0, 0], sizes = [1, 18, 18], strides = [1, 1, 1]} : vector<4x18x18xf32> to vector<1x18x18xf32>
    %11 = vector.shape_cast %10 : vector<1x18x18xf32> to vector<18x18xf32>
    %c1 = arith.constant 1 : index
    %c0_10 = arith.constant 0 : index
    %c0_11 = arith.constant 0 : index
    %12 = vector.load %arg2[%c1, %c0_10, %c0_11] : memref<4x18x512xf32, #tpu.memory_space<vmem>>, vector<1x18x512xf32>
    %13 = vector.shape_cast %12 : vector<1x18x512xf32> to vector<18x512xf32>
    %cst_12 = arith.constant dense<0.000000e+00> : vector<18x512xf32>
    %14 = tpu.matmul %11, %13, %cst_12 {dimension_numbers = #tpu.dot_dimension_numbers<[1], [0], [0], [1], [0, 0, 1, 1], [], []>} : vector<18x18xf32>, vector<18x512xf32>, vector<18x512xf32> -> vector<18x512xf32>
    %15 = arith.addf %9, %14 : vector<18x512xf32>
    %16 = vector.extract_strided_slice %4 {offsets = [2, 0, 0], sizes = [1, 18, 18], strides = [1, 1, 1]} : vector<4x18x18xf32> to vector<1x18x18xf32>
    %17 = vector.shape_cast %16 : vector<1x18x18xf32> to vector<18x18xf32>
    %c2 = arith.constant 2 : index
    %c0_13 = arith.constant 0 : index
    %c0_14 = arith.constant 0 : index
    %18 = vector.load %arg2[%c2, %c0_13, %c0_14] : memref<4x18x512xf32, #tpu.memory_space<vmem>>, vector<1x18x512xf32>
    %19 = vector.shape_cast %18 : vector<1x18x512xf32> to vector<18x512xf32>
    %cst_15 = arith.constant dense<0.000000e+00> : vector<18x512xf32>
    %20 = tpu.matmul %17, %19, %cst_15 {dimension_numbers = #tpu.dot_dimension_numbers<[1], [0], [0], [1], [0, 0, 1, 1], [], []>} : vector<18x18xf32>, vector<18x512xf32>, vector<18x512xf32> -> vector<18x512xf32>
    %21 = arith.addf %15, %20 : vector<18x512xf32>
    %22 = vector.extract_strided_slice %4 {offsets = [3, 0, 0], sizes = [1, 18, 18], strides = [1, 1, 1]} : vector<4x18x18xf32> to vector<1x18x18xf32>
    %23 = vector.shape_cast %22 : vector<1x18x18xf32> to vector<18x18xf32>
    %c3 = arith.constant 3 : index
    %c0_16 = arith.constant 0 : index
    %c0_17 = arith.constant 0 : index
    %24 = vector.load %arg2[%c3, %c0_16, %c0_17] : memref<4x18x512xf32, #tpu.memory_space<vmem>>, vector<1x18x512xf32>
    %25 = vector.shape_cast %24 : vector<1x18x512xf32> to vector<18x512xf32>
    %cst_18 = arith.constant dense<0.000000e+00> : vector<18x512xf32>
    %26 = tpu.matmul %23, %25, %cst_18 {dimension_numbers = #tpu.dot_dimension_numbers<[1], [0], [0], [1], [0, 0, 1, 1], [], []>} : vector<18x18xf32>, vector<18x512xf32>, vector<18x512xf32> -> vector<18x512xf32>
    %27 = arith.addf %21, %26 : vector<18x512xf32>
    %c0_19 = arith.constant 0 : index
    %c0_20 = arith.constant 0 : index
    %28 = vector.load %arg3[%c0_19, %c0_20] : memref<1x128xf32, #tpu.memory_space<vmem>>, vector<1x128xf32>
    %29 = vector.extract_strided_slice %27 {offsets = [0, 0], sizes = [16, 128], strides = [1, 1]} : vector<18x512xf32> to vector<16x128xf32>
    %30 = vector.extract_strided_slice %27 {offsets = [1, 128], sizes = [16, 128], strides = [1, 1]} : vector<18x512xf32> to vector<16x128xf32>
    %31 = arith.addf %29, %30 : vector<16x128xf32>
    %32 = vector.broadcast %28 : vector<1x128xf32> to vector<16x128xf32>
    %33 = arith.addf %31, %32 : vector<16x128xf32>
    %34 = vector.extract_strided_slice %27 {offsets = [1, 256], sizes = [16, 128], strides = [1, 1]} : vector<18x512xf32> to vector<16x128xf32>
    %35 = vector.extract_strided_slice %27 {offsets = [2, 384], sizes = [16, 128], strides = [1, 1]} : vector<18x512xf32> to vector<16x128xf32>
    %36 = arith.addf %34, %35 : vector<16x128xf32>
    %37 = vector.broadcast %28 : vector<1x128xf32> to vector<16x128xf32>
    %38 = arith.addf %36, %37 : vector<16x128xf32>
    %39 = vector.extract_strided_slice %33 {offsets = [0, 0], sizes = [16, 32], strides = [1, 1]} : vector<16x128xf32> to vector<16x32xf32>
    %40 = vector.extract_strided_slice %38 {offsets = [0, 0], sizes = [16, 32], strides = [1, 1]} : vector<16x128xf32> to vector<16x32xf32>
    %41 = tpu.concatenate %39, %40 in 1 : vector<16x32xf32>, vector<16x32xf32> -> vector<16x64xf32>
    %c0_21 = arith.constant 0 : index
    %c0_22 = arith.constant 0 : index
    %c0_23 = arith.constant 0 : index
    %c0_24 = arith.constant 0 : index
    %42 = vector.load %arg6[%c0_21, %c0_22, %c0_23, %c0_24] : memref<1x4x16x64xf32, #tpu.memory_space<vmem>>, vector<1x1x16x64xf32>
    %43 = vector.shape_cast %42 : vector<1x1x16x64xf32> to vector<16x64xf32>
    %44 = vector.shape_cast %41 : vector<16x64xf32> to vector<1x1x16x64xf32>
    tpu.vector_store %arg6[%c0_21, %c0_22, %c0_23, %c0_24], %44 {strides = array<i32>} : memref<1x4x16x64xf32, #tpu.memory_space<vmem>>, vector<1x1x16x64xf32>,
    %45 = vector.extract_strided_slice %33 {offsets = [0, 32], sizes = [16, 32], strides = [1, 1]} : vector<16x128xf32> to vector<16x32xf32>
    %46 = vector.extract_strided_slice %38 {offsets = [0, 32], sizes = [16, 32], strides = [1, 1]} : vector<16x128xf32> to vector<16x32xf32>
    %47 = tpu.concatenate %45, %46 in 1 : vector<16x32xf32>, vector<16x32xf32> -> vector<16x64xf32>
    %c0_25 = arith.constant 0 : index
    %c1_26 = arith.constant 1 : index
    %c0_27 = arith.constant 0 : index
    %c0_28 = arith.constant 0 : index
    %48 = vector.load %arg6[%c0_25, %c1_26, %c0_27, %c0_28] : memref<1x4x16x64xf32, #tpu.memory_space<vmem>>, vector<1x1x16x64xf32>
    %49 = vector.shape_cast %48 : vector<1x1x16x64xf32> to vector<16x64xf32>
    %50 = vector.shape_cast %47 : vector<16x64xf32> to vector<1x1x16x64xf32>
    tpu.vector_store %arg6[%c0_25, %c1_26, %c0_27, %c0_28], %50 {strides = array<i32>} : memref<1x4x16x64xf32, #tpu.memory_space<vmem>>, vector<1x1x16x64xf32>,
    %51 = vector.extract_strided_slice %33 {offsets = [0, 64], sizes = [16, 32], strides = [1, 1]} : vector<16x128xf32> to vector<16x32xf32>
    %52 = vector.extract_strided_slice %38 {offsets = [0, 64], sizes = [16, 32], strides = [1, 1]} : vector<16x128xf32> to vector<16x32xf32>
    %53 = tpu.concatenate %51, %52 in 1 : vector<16x32xf32>, vector<16x32xf32> -> vector<16x64xf32>
    %c0_29 = arith.constant 0 : index
    %c2_30 = arith.constant 2 : index
    %c0_31 = arith.constant 0 : index
    %c0_32 = arith.constant 0 : index
    %54 = vector.load %arg6[%c0_29, %c2_30, %c0_31, %c0_32] : memref<1x4x16x64xf32, #tpu.memory_space<vmem>>, vector<1x1x16x64xf32>
    %55 = vector.shape_cast %54 : vector<1x1x16x64xf32> to vector<16x64xf32>
    %56 = vector.shape_cast %53 : vector<16x64xf32> to vector<1x1x16x64xf32>
    tpu.vector_store %arg6[%c0_29, %c2_30, %c0_31, %c0_32], %56 {strides = array<i32>} : memref<1x4x16x64xf32, #tpu.memory_space<vmem>>, vector<1x1x16x64xf32>,
    %57 = vector.extract_strided_slice %33 {offsets = [0, 96], sizes = [16, 32], strides = [1, 1]} : vector<16x128xf32> to vector<16x32xf32>
    %58 = vector.extract_strided_slice %38 {offsets = [0, 96], sizes = [16, 32], strides = [1, 1]} : vector<16x128xf32> to vector<16x32xf32>
    %59 = tpu.concatenate %57, %58 in 1 : vector<16x32xf32>, vector<16x32xf32> -> vector<16x64xf32>
    %c0_33 = arith.constant 0 : index
    %c3_34 = arith.constant 3 : index
    %c0_35 = arith.constant 0 : index
    %c0_36 = arith.constant 0 : index
    %60 = vector.load %arg6[%c0_33, %c3_34, %c0_35, %c0_36] : memref<1x4x16x64xf32, #tpu.memory_space<vmem>>, vector<1x1x16x64xf32>
    %61 = vector.shape_cast %60 : vector<1x1x16x64xf32> to vector<16x64xf32>
    %62 = vector.shape_cast %59 : vector<16x64xf32> to vector<1x1x16x64xf32>
    tpu.vector_store %arg6[%c0_33, %c3_34, %c0_35, %c0_36], %62 {strides = array<i32>} : memref<1x4x16x64xf32, #tpu.memory_space<vmem>>, vector<1x1x16x64xf32>,
    return
  }
  func.func @transform_0(%arg0: i32, %arg1: i32) -> (i32, i32, i32) {
    %c0_i32 = arith.constant 0 : i32
    %c0_i32_0 = arith.constant 0 : i32
    %c0_i32_1 = arith.constant 0 : i32
    %c0_i32_2 = arith.constant 0 : i32
    return %c0_i32, %c0_i32_0, %c0_i32_1 : i32, i32, i32
  }
  func.func @transform_1(%arg0: i32, %arg1: i32) -> (i32, i32) {
    %c0_i32 = arith.constant 0 : i32
    %c0_i32_0 = arith.constant 0 : i32
    %c0_i32_1 = arith.constant 0 : i32
    return %c0_i32, %c0_i32_0 : i32, i32
  }
  func.func @transform_2(%arg0: i32, %arg1: i32) -> (i32, i32, i32, i32) {
    %c0_i32 = arith.constant 0 : i32
    %c0_i32_0 = arith.constant 0 : i32
    %c0_i32_1 = arith.constant 0 : i32
    return %arg0, %c0_i32, %arg1, %c0_i32_0 : i32, i32, i32, i32
  }
  func.func @transform_3(%arg0: i32, %arg1: i32) -> (i32, i32, i32, i32) {
    %c1_i32 = arith.constant 1 : i32
    %0 = arith.addi %arg1, %c1_i32 : i32
    %c2_i32 = arith.constant 2 : i32
    %1 = arith.muli %0, %c2_i32 : i32
    %c0_i32 = arith.constant 0 : i32
    %c0_i32_0 = arith.constant 0 : i32
    %c0_i32_1 = arith.constant 0 : i32
    return %arg0, %c0_i32, %1, %c0_i32_0 : i32, i32, i32, i32
  }
  func.func @transform_4(%arg0: i32, %arg1: i32) -> (i32, i32, i32, i32) {
    %c0_i32 = arith.constant 0 : i32
    %c0_i32_0 = arith.constant 0 : i32
    %c0_i32_1 = arith.constant 0 : i32
    return %arg0, %c0_i32, %arg1, %c0_i32_0 : i32, i32, i32, i32
  }
}

</mosaic_0001>

<llo_original>
// kernel: tpu_custom_call.1
$region0: #{tpu_custom_call.1}
  #allocation0 [shape = 'u32[]', space=smem, size = 0x4, offset = 0x4, fixed_abs, tag = 'smem constant byte address 0x4 - core index']
  #allocation1 [shape = 'u32[144,128]{1,0:T(1,128)}', space=vmem, size = 0x12000, scoped, tag = 'internal scratch']
  %s0 = inlined_call_operand.vmem [shape: f32[4,18,512], index: 0, kind: input, shape index: {}]
  %s1 = inlined_call_operand.vmem [shape: f32[1,128], index: 1, kind: input, shape index: {}]
  %s2 = inlined_call_operand.vmem [shape: f32[2,4,24,18], index: 2, kind: input, shape index: {}]
  %s3 = inlined_call_operand.vmem [shape: f32[2,4,24,18], index: 3, kind: input, shape index: {}]
  %s4 = inlined_call_operand.hbm [shape: f32[2,4,16,64], index: 4, kind: output, shape index: {}]
  %s5 = sld [smem:[#allocation0]]
  $region139: #{tpu_custom_call.1} parent=0
    _
  %s7 = ssub.s32 1, %s5
  %s8 = scalar_select 0, %s7, %s5
  $region1: #{tpu_custom_call.1} parent=0
    #allocation2 [shape = 'u8[65536]{0}', space=vmem, size = 0x10000, scoped, tag = 'input window, operand 2']
    #allocation3 [shape = 'u8[32768]{0}', space=vmem, size = 0x8000, scoped, tag = 'input window, operand 3']
    #allocation4 [shape = 'u8[65536]{0}', space=vmem, size = 0x10000, scoped, tag = 'output window, operand 0']
    #allocation5 [shape = 's32[2]{0}', space=sflag, size = 0x8, scoped, tag = 'scoped memory for tpu_custom_call.1']
    %9 = vsyncpa [#allocation5], 0
    %s10 = scalar_lea.sflag [#allocation5], 1
    %11 = vsyncpa %s10, 0
    loop: start=0, step=1, limit=4
    $region2: #{tpu_custom_call.1} parent=1 // loop_pre_header
      _
    $region3: #{tpu_custom_call.1} parent=1 // loop_header
      %s13 = sphi 0, %s17
      %p14 = scmp.ge.s32.totalorder %s13, 4
      %s20 = sphi 0, %s32
      %s21 = sphi 0, %s28
      %s22 = sphi 0, %s20
      %s23 = sphi 0, %s21
      %s24 = sphi 0, %s22
      %s25 = sphi 0, %s23
      %s33 = sphi 0, %s33
      %s35 = sphi 0, %s33
      %s36 = sphi 0, %s35
      %s50 = sphi 0, %s36
      %s54 = sphi 0, %s54
      %s56 = sphi 0, %s54
      %s57 = sphi 0, %s56
      %s71 = sphi 0, %s57
      %s79 = sphi 0, %s81
      %s82 = sphi 0, %s79
      %s83 = sphi 0, %s82
      %s99 = sphi 0, %s83
      %s111 = sphi 0, %s113
      %s114 = sphi 0, %s111
      %s115 = sphi 0, %s114
      %s131 = sphi 0, %s115
      %s139 = sphi 0, %s141
      %s142 = sphi 0, %s139
      %s143 = sphi 0, %s142
      %s159 = sphi 0, %s143
    $region4: #{tpu_custom_call.1} parent=1 // loop_header_branch
      %16 = sbr.rel (%p14) target = $region8
    $region5: #{tpu_custom_call.1} parent=1 // loop_body
      %s18 = ssub.s32 %s13, 1
      %s19 = ssub.s32 %s13, 2
      %s26 = sadd.s32 1, %s21
      %p27 = scmp.ge.s32.totalorder %s26, 1
      %s28 = scalar_select %p27, 0, %s26
      %s29 = sadd.s32 1, %s20
      %s30 = scalar_select %p27, %s29, %s20
      %p31 = scmp.ge.s32.totalorder %s30, 2
      %s32 = scalar_select %p31, 0, %s30
      %s34 = sadd.s32 %s33, 1
      %p37 = scmp.eq.s32.totalorder %s13, 1
      %p38 = scmp.ne.s32.totalorder %s33, %s35
      %p39 = scmp.eq.s32.totalorder %s13, 0
      %p40 = por %p38, %p39
      %p41 = scmp.ne.s32.totalorder %s33, %s35
      %p42 = scmp.eq.s32.totalorder %s18, 1
      %p43 = por %p41, %p42
      %p44 = scmp.ne.s32.totalorder %s35, %s36
      %p45 = scmp.eq.s32.totalorder %s18, 0
      %p46 = por %p44, %p45
      %p47 = scmp.ne.s32.totalorder %s35, %s36
      %p48 = scmp.eq.s32.totalorder %s19, 1
      %p49 = por %p47, %p48
      %p51 = scmp.ne.s32.totalorder %s36, %s50
      %p52 = scmp.eq.s32.totalorder %s19, 0
      %p53 = por %p51, %p52
      %s55 = sadd.s32 %s54, 1
      %p58 = scmp.eq.s32.totalorder %s13, 1
      %p59 = scmp.ne.s32.totalorder %s54, %s56
      %p60 = scmp.eq.s32.totalorder %s13, 0
      %p61 = por %p59, %p60
      %p62 = scmp.ne.s32.totalorder %s54, %s56
      %p63 = scmp.eq.s32.totalorder %s18, 1
      %p64 = por %p62, %p63
      %p65 = scmp.ne.s32.totalorder %s56, %s57
      %p66 = scmp.eq.s32.totalorder %s18, 0
      %p67 = por %p65, %p66
      %p68 = scmp.ne.s32.totalorder %s56, %s57
      %p69 = scmp.eq.s32.totalorder %s19, 1
      %p70 = por %p68, %p69
      %p72 = scmp.ne.s32.totalorder %s57, %s71
      %p73 = scmp.eq.s32.totalorder %s19, 0
      %p74 = por %p72, %p73
      %s75 = ssub.s32 %s20, %s32
      %s76 = ssub.s32 %s21, %s28
      %s77 = sor.u32 %s75, %s76
      %p78 = scmp.eq.s32.totalorder %s77, 0
      %s80 = sadd.s32 %s79, 1
      %s81 = scalar_select %p78, %s79, %s80
      %p84 = pneg %p78
      %p85 = scmp.eq.s32.totalorder %s13, 1
      %p86 = por %p84, %p85
      %p87 = scmp.ne.s32.totalorder %s79, %s82
      %p88 = scmp.eq.s32.totalorder %s13, 0
      %p89 = por %p87, %p88
      %p90 = scmp.ne.s32.totalorder %s79, %s82
      %p91 = scmp.eq.s32.totalorder %s18, 1
      %p92 = por %p90, %p91
      %p93 = scmp.ne.s32.totalorder %s82, %s83
      %p94 = scmp.eq.s32.totalorder %s18, 0
      %p95 = por %p93, %p94
      %p96 = scmp.ne.s32.totalorder %s82, %s83
      %p97 = scmp.eq.s32.totalorder %s19, 1
      %p98 = por %p96, %p97
      %p100 = scmp.ne.s32.totalorder %s83, %s99
      %p101 = scmp.eq.s32.totalorder %s19, 0
      %p102 = por %p100, %p101
      %s103 = sadd.s32 %s21, 1
      %s104 = smul.u32 %s103, 2
      %s105 = sadd.s32 %s28, 1
      %s106 = smul.u32 %s105, 2
      %s107 = ssub.s32 %s20, %s32
      %s108 = ssub.s32 %s104, %s106
      %s109 = sor.u32 %s107, %s108
      %p110 = scmp.eq.s32.totalorder %s109, 0
      %s112 = sadd.s32 %s111, 1
      %s113 = scalar_select %p110, %s111, %s112
      %p116 = pneg %p110
      %p117 = scmp.eq.s32.totalorder %s13, 1
      %p118 = por %p116, %p117
      %p119 = scmp.ne.s32.totalorder %s111, %s114
      %p120 = scmp.eq.s32.totalorder %s13, 0
      %p121 = por %p119, %p120
      %p122 = scmp.ne.s32.totalorder %s111, %s114
      %p123 = scmp.eq.s32.totalorder %s18, 1
      %p124 = por %p122, %p123
      %p125 = scmp.ne.s32.totalorder %s114, %s115
      %p126 = scmp.eq.s32.totalorder %s18, 0
      %p127 = por %p125, %p126
      %p128 = scmp.ne.s32.totalorder %s114, %s115
      %p129 = scmp.eq.s32.totalorder %s19, 1
      %p130 = por %p128, %p129
      %p132 = scmp.ne.s32.totalorder %s115, %s131
      %p133 = scmp.eq.s32.totalorder %s19, 0
      %p134 = por %p132, %p133
      %s135 = ssub.s32 %s20, %s32
      %s136 = ssub.s32 %s21, %s28
      %s137 = sor.u32 %s135, %s136
      %p138 = scmp.eq.s32.totalorder %s137, 0
      %s140 = sadd.s32 %s139, 1
      %s141 = scalar_select %p138, %s139, %s140
      %p144 = pneg %p138
      %p145 = scmp.eq.s32.totalorder %s13, 1
      %p146 = por %p144, %p145
      %p147 = scmp.ne.s32.totalorder %s139, %s142
      %p148 = scmp.eq.s32.totalorder %s13, 0
      %p149 = por %p147, %p148
      %p150 = scmp.ne.s32.totalorder %s139, %s142
      %p151 = scmp.eq.s32.totalorder %s18, 1
      %p152 = por %p150, %p151
      %p153 = scmp.ne.s32.totalorder %s142, %s143
      %p154 = scmp.eq.s32.totalorder %s18, 0
      %p155 = por %p153, %p154
      %p156 = scmp.ne.s32.totalorder %s142, %s143
      %p157 = scmp.eq.s32.totalorder %s19, 1
      %p158 = por %p156, %p157
      %p160 = scmp.ne.s32.totalorder %s143, %s159
      %p161 = scmp.eq.s32.totalorder %s19, 0
      %p162 = por %p160, %p161
      %p163 = scmp.le.s32.totalorder 1, %s13
      %p164 = scmp.lt.s32.totalorder %s13, 3
      %p165 = pnand %p163, %p164
      %p166 = pneg %p165
      // Predicated region
      $region9: #{tpu_custom_call.1} parent=5 // pred_check
        _
      $region10: #{tpu_custom_call.1} parent=5 // pred_check_branch
        %168 = sbr.rel (%p165) target = $region12
      $region11: #{tpu_custom_call.1} parent=5 // pred_region
        %s169 = ssub.s32 %s13, 1
        // Predicated region
        $region13: #{tpu_custom_call.1} parent=11 // pred_check
          %p170 = pneg %p46
        $region14: #{tpu_custom_call.1} parent=11 // pred_check_branch
          %172 = sbr.rel (%p170) target = $region16
        $region15: #{tpu_custom_call.1} parent=11 // pred_region
          _
        $region16: #{tpu_custom_call.1} parent=11 // pred_fallthru
          _
        // Predicated region
        $region17: #{tpu_custom_call.1} parent=11 // pred_check
          %p173 = pneg %p67
        $region18: #{tpu_custom_call.1} parent=11 // pred_check_branch
          %175 = sbr.rel (%p173) target = $region20
        $region19: #{tpu_custom_call.1} parent=11 // pred_region
          _
        $region20: #{tpu_custom_call.1} parent=11 // pred_fallthru
          _
      $region12: #{tpu_custom_call.1} parent=5 // pred_fallthru
        _
      %p176 = scmp.lt.s32.totalorder %s13, 2
      // Predicated region
      $region21: #{tpu_custom_call.1} parent=5 // pred_check
        %p177 = pneg %p176
      $region22: #{tpu_custom_call.1} parent=5 // pred_check_branch
        %179 = sbr.rel (%p177) target = $region24
      $region23: #{tpu_custom_call.1} parent=5 // pred_region
        // Predicated region
        $region25: #{tpu_custom_call.1} parent=23 // pred_check
          %p180 = pneg %p89
        $region26: #{tpu_custom_call.1} parent=23 // pred_check_branch
          %182 = sbr.rel (%p180) target = $region28
        $region27: #{tpu_custom_call.1} parent=23 // pred_region
          %s183 = sand.u32 %s79, 1
          %s184 = sand.u32 %s79, 1
          %s185 = smul.addr %s184, 64
          %s186 = scalar_lea.vmem [#allocation2], %s185
          %s187 = smul.u32 2, %s21
          %s188 = ssub.s32 3, %s187
          %p189 = scmp.lt.s32.totalorder %s188, 2
          %s190 = scalar_select %p189, %s188, 2
          %s191 = smul.u32 512, %s190
          %p192 = scmp.ne.s32.totalorder 0, %s191
          %s193 = smul.addr %s20, 12
          %s194 = sadd.s32 %s187, %s193
          %s195 = smul.addr %s194, 8
          %s196 = scalar_lea.vmem %s2, %s195
          // Predicated region
          $region29: #{tpu_custom_call.1} parent=27 // pred_check
            %p197 = pneg %p192
          $region30: #{tpu_custom_call.1} parent=27 // pred_check_branch
            %199 = sbr.rel (%p197) target = $region32
          $region31: #{tpu_custom_call.1} parent=27 // pred_region
            // Predicated region
            $region33: #{tpu_custom_call.1} parent=31 // pred_check
              _
            $region34: #{tpu_custom_call.1} parent=31 // pred_check_branch
              %201 = sbr.rel (0) target = $region36
            $region35: #{tpu_custom_call.1} parent=31 // pred_region
              // Predicated region
              $region55: #{tpu_custom_call.1} parent=35 // pred_check
                _
              $region56: #{tpu_custom_call.1} parent=35 // pred_check_branch
                %270 = sbr.rel (0) target = $region58
              $region57: #{tpu_custom_call.1} parent=35 // pred_region
                %s271 = sshrl.u32 %s190, 1
                // While loop
                $region59: #{tpu_custom_call.1} parent=57 // loop_pre_header
                  _
                $region60: #{tpu_custom_call.1} parent=57 // loop_header
                  %s273 = sphi 0, %s275
                  %p274 = scmp.ge.s32.totalorder %s273, %s271
                  %s278 = sphi 0, %s299
                  %s279 = sphi %s196, %s302
                  %s280 = sphi %s186, %s303
                $region61: #{tpu_custom_call.1} parent=57 // loop_header_branch
                  %277 = sbr.rel (%p274) target = $region65
                $region62: #{tpu_custom_call.1} parent=57 // loop_body
                  %v281 = vld [vmem:[%s279] sm:$0xff]
                  %282 = vst [vmem:[%s280] sm:$0xff] %v281
                  %v283 = vld [vmem:[%s279 + $0x8] sm:$0xff]
                  %284 = vst [vmem:[%s280 + $0x8] sm:$0xff] %v283
                  %v285 = vld [vmem:[%s279 + $0x18] sm:$0xff]
                  %286 = vst [vmem:[%s280 + $0x10] sm:$0xff] %v285
                  %v287 = vld [vmem:[%s279 + $0x20] sm:$0xff]
                  %288 = vst [vmem:[%s280 + $0x18] sm:$0xff] %v287
                  %v289 = vld [vmem:[%s279 + $0x30] sm:$0xff]
                  %290 = vst [vmem:[%s280 + $0x20] sm:$0xff] %v289
                  %v291 = vld [vmem:[%s279 + $0x38] sm:$0xff]
                  %292 = vst [vmem:[%s280 + $0x28] sm:$0xff] %v291
                  %v293 = vld [vmem:[%s279 + $0x48] sm:$0xff]
                  %294 = vst [vmem:[%s280 + $0x30] sm:$0xff] %v293
                  %v295 = vld [vmem:[%s279 + $0x50] sm:$0xff]
                  %296 = vst [vmem:[%s280 + $0x38] sm:$0xff] %v295
                  %s297 = sadd.s32 1, %s278
                  %p298 = scmp.ge.s32.totalorder %s297, %s271
                  %s299 = scalar_select %p298, 0, %s297
                  %s300 = smul.u32 %s299, 16
                  %s301 = smul.u32 %s299, 16
                  %s302 = scalar_lea.vmem %s196, %s300
                  %s303 = scalar_lea.vmem %s186, %s301 [#allocation2]
                $region63: #{tpu_custom_call.1} parent=57 // loop_footer
                  %s275 = sadd.s32 %s273, 1
                $region64: #{tpu_custom_call.1} parent=57 // loop_footer_branch
                  %272 = sbr.rel target = $region60
                $region65: #{tpu_custom_call.1} parent=57 // loop_exit
                  _
                %s304 = sshrl.u32 %s190, 1
                %s305 = sand.u32 %s190, 1
                %s306 = smul.u32 %s304, 2
                %s307 = smul.u32 8, %s306
                %s308 = scalar_lea.vmem %s196, %s307
                %s309 = smul.u32 8, %s306
                %s310 = scalar_lea.vmem %s186, %s309 [#allocation2]
                // While loop
                $region66: #{tpu_custom_call.1} parent=57 // loop_pre_header
                  _
                $region67: #{tpu_custom_call.1} parent=57 // loop_header
                  %s312 = sphi 0, %s314
                  %p313 = scmp.ge.s32.totalorder %s312, %s305
                  %s317 = sphi 0, %s330
                  %s318 = sphi %s308, %s333
                  %s319 = sphi %s310, %s334
                $region68: #{tpu_custom_call.1} parent=57 // loop_header_branch
                  %316 = sbr.rel (%p313) target = $region72
                $region69: #{tpu_custom_call.1} parent=57 // loop_body
                  %v320 = vld [vmem:[%s318] sm:$0xff]
                  %321 = vst [vmem:[%s319] sm:$0xff] %v320
                  %v322 = vld [vmem:[%s318 + $0x18] sm:$0xff]
                  %323 = vst [vmem:[%s319 + $0x10] sm:$0xff] %v322
                  %v324 = vld [vmem:[%s318 + $0x30] sm:$0xff]
                  %325 = vst [vmem:[%s319 + $0x20] sm:$0xff] %v324
                  %v326 = vld [vmem:[%s318 + $0x48] sm:$0xff]
                  %327 = vst [vmem:[%s319 + $0x30] sm:$0xff] %v326
                  %s328 = sadd.s32 1, %s317
                  %p329 = scmp.ge.s32.totalorder %s328, %s305
                  %s330 = scalar_select %p329, 0, %s328
                  %s331 = smul.u32 %s330, 8
                  %s332 = smul.u32 %s330, 8
                  %s333 = scalar_lea.vmem %s308, %s331
                  %s334 = scalar_lea.vmem %s310, %s332 [#allocation2]
                $region70: #{tpu_custom_call.1} parent=57 // loop_footer
                  %s314 = sadd.s32 %s312, 1
                $region71: #{tpu_custom_call.1} parent=57 // loop_footer_branch
                  %311 = sbr.rel target = $region67
                $region72: #{tpu_custom_call.1} parent=57 // loop_exit
                  _
              $region58: #{tpu_custom_call.1} parent=35 // pred_fallthru
                _
              // Predicated region
              $region73: #{tpu_custom_call.1} parent=35 // pred_check
                _
              $region74: #{tpu_custom_call.1} parent=35 // pred_check_branch
                %336 = sbr.rel target = $region76
              $region75: #{tpu_custom_call.1} parent=35 // pred_region
                _
              $region76: #{tpu_custom_call.1} parent=35 // pred_fallthru
                _
            $region36: #{tpu_custom_call.1} parent=31 // pred_fallthru
              _
            // Predicated region
            $region37: #{tpu_custom_call.1} parent=31 // pred_check
              _
            $region38: #{tpu_custom_call.1} parent=31 // pred_check_branch
              %203 = sbr.rel target = $region40
            $region39: #{tpu_custom_call.1} parent=31 // pred_region
              %s205 = sshrl.u32 %s190, 1
              // While loop
              $region41: #{tpu_custom_call.1} parent=39 // loop_pre_header
                _
              $region42: #{tpu_custom_call.1} parent=39 // loop_header
                %s207 = sphi 0, %s209
                %p208 = scmp.ge.s32.totalorder %s207, %s205
                %s212 = sphi 0, %s233
                %s213 = sphi %s196, %s236
                %s214 = sphi %s186, %s237
              $region43: #{tpu_custom_call.1} parent=39 // loop_header_branch
                %211 = sbr.rel (%p208) target = $region47
              $region44: #{tpu_custom_call.1} parent=39 // loop_body
                %v215 = vld [vmem:[%s213] sm:$0xff]
                %216 = vst [vmem:[%s214] sm:$0xff] %v215
                %v217 = vld [vmem:[%s213 + $0x8] sm:$0xff]
                %218 = vst [vmem:[%s214 + $0x8] sm:$0xff] %v217
                %v219 = vld [vmem:[%s213 + $0x18] sm:$0xff]
                %220 = vst [vmem:[%s214 + $0x10] sm:$0xff] %v219
                %v221 = vld [vmem:[%s213 + $0x20] sm:$0xff]
                %222 = vst [vmem:[%s214 + $0x18] sm:$0xff] %v221
                %v223 = vld [vmem:[%s213 + $0x30] sm:$0xff]
                %224 = vst [vmem:[%s214 + $0x20] sm:$0xff] %v223
                %v225 = vld [vmem:[%s213 + $0x38] sm:$0xff]
                %226 = vst [vmem:[%s214 + $0x28] sm:$0xff] %v225
                %v227 = vld [vmem:[%s213 + $0x48] sm:$0xff]
                %228 = vst [vmem:[%s214 + $0x30] sm:$0xff] %v227
                %v229 = vld [vmem:[%s213 + $0x50] sm:$0xff]
                %230 = vst [vmem:[%s214 + $0x38] sm:$0xff] %v229
                %s231 = sadd.s32 1, %s212
                %p232 = scmp.ge.s32.totalorder %s231, %s205
                %s233 = scalar_select %p232, 0, %s231
                %s234 = smul.u32 %s233, 16
                %s235 = smul.u32 %s233, 16
                %s236 = scalar_lea.vmem %s196, %s234
                %s237 = scalar_lea.vmem %s186, %s235 [#allocation2]
              $region45: #{tpu_custom_call.1} parent=39 // loop_footer
                %s209 = sadd.s32 %s207, 1
              $region46: #{tpu_custom_call.1} parent=39 // loop_footer_branch
                %206 = sbr.rel target = $region42
              $region47: #{tpu_custom_call.1} parent=39 // loop_exit
                _
              %s238 = sshrl.u32 %s190, 1
              %s239 = sand.u32 %s190, 1
              %s240 = smul.u32 %s238, 2
              %s241 = smul.u32 8, %s240
              %s242 = scalar_lea.vmem %s196, %s241
              %s243 = smul.u32 8, %s240
              %s244 = scalar_lea.vmem %s186, %s243 [#allocation2]
              // While loop
              $region48: #{tpu_custom_call.1} parent=39 // loop_pre_header
                _
              $region49: #{tpu_custom_call.1} parent=39 // loop_header
                %s246 = sphi 0, %s248
                %p247 = scmp.ge.s32.totalorder %s246, %s239
                %s251 = sphi 0, %s264
                %s252 = sphi %s242, %s267
                %s253 = sphi %s244, %s268
              $region50: #{tpu_custom_call.1} parent=39 // loop_header_branch
                %250 = sbr.rel (%p247) target = $region54
              $region51: #{tpu_custom_call.1} parent=39 // loop_body
                %v254 = vld [vmem:[%s252] sm:$0xff]
                %255 = vst [vmem:[%s253] sm:$0xff] %v254
                %v256 = vld [vmem:[%s252 + $0x18] sm:$0xff]
                %257 = vst [vmem:[%s253 + $0x10] sm:$0xff] %v256
                %v258 = vld [vmem:[%s252 + $0x30] sm:$0xff]
                %259 = vst [vmem:[%s253 + $0x20] sm:$0xff] %v258
                %v260 = vld [vmem:[%s252 + $0x48] sm:$0xff]
                %261 = vst [vmem:[%s253 + $0x30] sm:$0xff] %v260
                %s262 = sadd.s32 1, %s251
                %p263 = scmp.ge.s32.totalorder %s262, %s239
                %s264 = scalar_select %p263, 0, %s262
                %s265 = smul.u32 %s264, 8
                %s266 = smul.u32 %s264, 8
                %s267 = scalar_lea.vmem %s242, %s265
                %s268 = scalar_lea.vmem %s244, %s266 [#allocation2]
              $region52: #{tpu_custom_call.1} parent=39 // loop_footer
                %s248 = sadd.s32 %s246, 1
              $region53: #{tpu_custom_call.1} parent=39 // loop_footer_branch
                %245 = sbr.rel target = $region49
              $region54: #{tpu_custom_call.1} parent=39 // loop_exit
                _
            $region40: #{tpu_custom_call.1} parent=31 // pred_fallthru
              _
          $region32: #{tpu_custom_call.1} parent=27 // pred_fallthru
            _
          %337 = vnop
        $region28: #{tpu_custom_call.1} parent=23 // pred_fallthru
          _
        // Predicated region
        $region77: #{tpu_custom_call.1} parent=23 // pred_check
          %p338 = pneg %p121
        $region78: #{tpu_custom_call.1} parent=23 // pred_check_branch
          %340 = sbr.rel (%p338) target = $region80
        $region79: #{tpu_custom_call.1} parent=23 // pred_region
          %s341 = sand.u32 %s111, 1
          %s342 = sand.u32 %s111, 1
          %s343 = smul.addr %s342, 32
          %s344 = scalar_lea.vmem [#allocation3], %s343
          %s345 = sadd.s32 %s21, 1
          %s346 = smul.u32 %s345, 2
          %s347 = smul.addr %s20, 12
          %s348 = sadd.s32 %s346, %s347
          %s349 = smul.addr %s348, 8
          %s350 = scalar_lea.vmem %s3, %s349
          // Predicated region
          $region81: #{tpu_custom_call.1} parent=79 // pred_check
            _
          $region82: #{tpu_custom_call.1} parent=79 // pred_check_branch
            %352 = sbr.rel (0) target = $region84
          $region83: #{tpu_custom_call.1} parent=79 // pred_region
            // Predicated region
            $region85: #{tpu_custom_call.1} parent=83 // pred_check
              _
            $region86: #{tpu_custom_call.1} parent=83 // pred_check_branch
              %354 = sbr.rel (0) target = $region88
            $region87: #{tpu_custom_call.1} parent=83 // pred_region
              // Predicated region
              $region100: #{tpu_custom_call.1} parent=87 // pred_check
                _
              $region101: #{tpu_custom_call.1} parent=87 // pred_check_branch
                %375 = sbr.rel (0) target = $region103
              $region102: #{tpu_custom_call.1} parent=87 // pred_region
                loop: start=0, step=1, limit=1
                $region104: #{tpu_custom_call.1} parent=102 // loop_pre_header
                  _
                $region105: #{tpu_custom_call.1} parent=102 // loop_header
                  %s377 = sphi 0, %s381
                  %p378 = scmp.ge.s32.totalorder %s377, 1
                  %s382 = sphi %s350, %s350
                  %s383 = sphi %s344, %s344
                $region106: #{tpu_custom_call.1} parent=102 // loop_header_branch
                  %380 = sbr.rel (%p378) target = $region110
                $region107: #{tpu_custom_call.1} parent=102 // loop_body
                  %v384 = vld [vmem:[%s382] sm:$0xff]
                  %385 = vst [vmem:[%s383] sm:$0xff] %v384
                  %v386 = vld [vmem:[%s382 + $0x18] sm:$0xff]
                  %387 = vst [vmem:[%s383 + $0x8] sm:$0xff] %v386
                  %v388 = vld [vmem:[%s382 + $0x30] sm:$0xff]
                  %389 = vst [vmem:[%s383 + $0x10] sm:$0xff] %v388
                  %v390 = vld [vmem:[%s382 + $0x48] sm:$0xff]
                  %391 = vst [vmem:[%s383 + $0x18] sm:$0xff] %v390
                $region108: #{tpu_custom_call.1} parent=102 // loop_footer
                  %s381 = sadd.s32 1, %s377
                $region109: #{tpu_custom_call.1} parent=102 // loop_footer_branch
                  %376 = sbr.rel target = $region105
                $region110: #{tpu_custom_call.1} parent=102 // loop_exit
                  _
              $region103: #{tpu_custom_call.1} parent=87 // pred_fallthru
                _
              // Predicated region
              $region111: #{tpu_custom_call.1} parent=87 // pred_check
                _
              $region112: #{tpu_custom_call.1} parent=87 // pred_check_branch
                %393 = sbr.rel target = $region114
              $region113: #{tpu_custom_call.1} parent=87 // pred_region
                _
              $region114: #{tpu_custom_call.1} parent=87 // pred_fallthru
                _
            $region88: #{tpu_custom_call.1} parent=83 // pred_fallthru
              _
            // Predicated region
            $region89: #{tpu_custom_call.1} parent=83 // pred_check
              _
            $region90: #{tpu_custom_call.1} parent=83 // pred_check_branch
              %356 = sbr.rel target = $region92
            $region91: #{tpu_custom_call.1} parent=83 // pred_region
              loop: start=0, step=1, limit=1
              $region93: #{tpu_custom_call.1} parent=91 // loop_pre_header
                _
              $region94: #{tpu_custom_call.1} parent=91 // loop_header
                %s359 = sphi 0, %s363
                %p360 = scmp.ge.s32.totalorder %s359, 1
                %s364 = sphi %s350, %s350
                %s365 = sphi %s344, %s344
              $region95: #{tpu_custom_call.1} parent=91 // loop_header_branch
                %362 = sbr.rel (%p360) target = $region99
              $region96: #{tpu_custom_call.1} parent=91 // loop_body
                %v366 = vld [vmem:[%s364] sm:$0xff]
                %367 = vst [vmem:[%s365] sm:$0xff] %v366
                %v368 = vld [vmem:[%s364 + $0x18] sm:$0xff]
                %369 = vst [vmem:[%s365 + $0x8] sm:$0xff] %v368
                %v370 = vld [vmem:[%s364 + $0x30] sm:$0xff]
                %371 = vst [vmem:[%s365 + $0x10] sm:$0xff] %v370
                %v372 = vld [vmem:[%s364 + $0x48] sm:$0xff]
                %373 = vst [vmem:[%s365 + $0x18] sm:$0xff] %v372
              $region97: #{tpu_custom_call.1} parent=91 // loop_footer
                %s363 = sadd.s32 1, %s359
              $region98: #{tpu_custom_call.1} parent=91 // loop_footer_branch
                %358 = sbr.rel target = $region94
              $region99: #{tpu_custom_call.1} parent=91 // loop_exit
                _
            $region92: #{tpu_custom_call.1} parent=83 // pred_fallthru
              _
          $region84: #{tpu_custom_call.1} parent=79 // pred_fallthru
            _
          %394 = vnop
        $region80: #{tpu_custom_call.1} parent=23 // pred_fallthru
          _
      $region24: #{tpu_custom_call.1} parent=5 // pred_fallthru
        _
      %p395 = scmp.le.s32.totalorder 1, %s13
      %p396 = scmp.lt.s32.totalorder %s13, 3
      %p397 = pnand %p395, %p396
      %p398 = pneg %p397
      // Predicated region
      $region115: #{tpu_custom_call.1} parent=5 // pred_check
        _
      $region116: #{tpu_custom_call.1} parent=5 // pred_check_branch
        %400 = sbr.rel (%p397) target = $region118
      $region117: #{tpu_custom_call.1} parent=5 // pred_region
        %s401 = ssub.s32 %s13, 1
        %s402 = sand.u32 %s82, 1
        %s403 = sand.u32 %s82, 1
        %s404 = smul.addr %s403, 64
        %s405 = scalar_lea.vmem [#allocation2], %s404
        // Predicated region
        $region119: #{tpu_custom_call.1} parent=117 // pred_check
          %p406 = pneg %p95
        $region120: #{tpu_custom_call.1} parent=117 // pred_check_branch
          %408 = sbr.rel (%p406) target = $region122
        $region121: #{tpu_custom_call.1} parent=117 // pred_region
          _
        $region122: #{tpu_custom_call.1} parent=117 // pred_fallthru
          _
        %s409 = sand.u32 %s114, 1
        %s410 = sand.u32 %s114, 1
        %s411 = smul.addr %s410, 32
        %s412 = scalar_lea.vmem [#allocation3], %s411
        // Predicated region
        $region123: #{tpu_custom_call.1} parent=117 // pred_check
          %p413 = pneg %p127
        $region124: #{tpu_custom_call.1} parent=117 // pred_check_branch
          %415 = sbr.rel (%p413) target = $region126
        $region125: #{tpu_custom_call.1} parent=117 // pred_region
          _
        $region126: #{tpu_custom_call.1} parent=117 // pred_fallthru
          _
        %p416 = pneg %p46
        %p417 = pneg %p43
        %p418 = pneg %p67
        %p419 = pneg %p64
        %s420 = sand.u32 %s82, 1
        %s421 = sand.u32 %s82, 1
        %s422 = smul.addr %s421, 64
        %s423 = scalar_lea.vmem [#allocation2], %s422
        %p424 = pneg %p95
        %p425 = pneg %p92
        %s426 = sand.u32 %s114, 1
        %s427 = sand.u32 %s114, 1
        %s428 = smul.addr %s427, 32
        %s429 = scalar_lea.vmem [#allocation3], %s428
        %p430 = pneg %p127
        %p431 = pneg %p124
        %p432 = pneg %p155
        %p433 = pneg %p152
        %s434 = sand.u32 %s142, 1
        %s435 = scalar_lea.sflag [#allocation5], %s434
        %s436 = sand.u32 %s142, 1
        %s437 = smul.addr %s436, 64
        %s438 = scalar_lea.vmem [#allocation4], %s437
        %s439 = smul.u32 2, %s23
        %s440 = ssub.s32 3, %s439
        %p441 = scmp.lt.s32.totalorder %s440, 2
        %s442 = scalar_select %p441, %s440, 2
        %s443 = smul.u32 512, %s442
        %s444 = sadd.s32 %s23, 1
        %s445 = smul.u32 %s444, 2
        %s446 = smul.u32 2, %s23
        %v447 = vld [vmem:[%s405] sm:$0xff]
        %v448 = vld [vmem:[%s405 + $0x8] sm:$0xff]
        %v449 = vld [vmem:[%s405 + $0x10] sm:$0xff]
        %v450 = vld [vmem:[%s405 + $0x18] sm:$0xff]
        %v451 = vld [vmem:[%s405 + $0x20] sm:$0xff]
        %v452 = vld [vmem:[%s405 + $0x28] sm:$0xff]
        %v453 = vld [vmem:[%s405 + $0x30] sm:$0xff]
        %v454 = vld [vmem:[%s405 + $0x38] sm:$0xff]
        %v455 = vld [vmem:[%s412] sm:$0x3]
        %v456 = vld [vmem:[%s412 + $0x8] sm:$0x3]
        %v457 = vld [vmem:[%s412 + $0x10] sm:$0x3]
        %v458 = vld [vmem:[%s412 + $0x18] sm:$0x3]
        %v459 = vld [vmem:[%s0] sm:$0xff]
        %v460 = vld [vmem:[%s0 + $0x8] sm:$0xff]
        %v461 = vld [vmem:[%s0 + $0x10] sm:$0xff]
        %v462 = vld [vmem:[%s0 + $0x18] sm:$0xff]
        %v463 = vld [vmem:[%s0 + $0x20] sm:$0xff]
        %v464 = vld [vmem:[%s0 + $0x28] sm:$0xff]
        %v465 = vld [vmem:[%s0 + $0x30] sm:$0xff]
        %v466 = vld [vmem:[%s0 + $0x38] sm:$0xff]
        %v467 = vld [vmem:[%s0 + $0x40] sm:$0x3]
        %v468 = vld [vmem:[%s0 + $0x48] sm:$0x3]
        %v469 = vld [vmem:[%s0 + $0x50] sm:$0x3]
        %v470 = vld [vmem:[%s0 + $0x58] sm:$0x3]
        %s471 = scalar_lea.vmem %s0, 96
        %v472 = vld [vmem:[%s471] sm:$0xff]
        %v473 = vld [vmem:[%s471 + $0x8] sm:$0xff]
        %v474 = vld [vmem:[%s471 + $0x10] sm:$0xff]
        %v475 = vld [vmem:[%s471 + $0x18] sm:$0xff]
        %v476 = vld [vmem:[%s471 + $0x20] sm:$0xff]
        %v477 = vld [vmem:[%s471 + $0x28] sm:$0xff]
        %v478 = vld [vmem:[%s471 + $0x30] sm:$0xff]
        %v479 = vld [vmem:[%s471 + $0x38] sm:$0xff]
        %v480 = vld [vmem:[%s471 + $0x40] sm:$0x3]
        %v481 = vld [vmem:[%s471 + $0x48] sm:$0x3]
        %v482 = vld [vmem:[%s471 + $0x50] sm:$0x3]
        %v483 = vld [vmem:[%s471 + $0x58] sm:$0x3]
        %vm484 = vcmask 146432
        %v486 = vsel %vm484, %v449, 0
        %v489 = vsel %vm484, %v450, 0
        %v492 = vsel %vm484, %v456, 0
        %vm494 = vcmask 1041408
        %v496 = vsel %vm494, %v480, 0
        %v499 = vsel %vm494, %v481, 0
        %v502 = vsel %vm494, %v482, 0
        %v505 = vsel %vm494, %v483, 0
        %507 = vmatprep.subr.mxu0 %v473
        %508 = vmatpush1.msra.mxu0 %v472
        %509 = vmatprep.subr.mxu0 %v477
        %510 = vmatpush1.msra.mxu0 %v476
        %511 = vmatprep.subr.mxu0 %v499
        %512 = vmatpush1.msra.mxu0 %v496
        %513 = vmatprep.subr.mxu0 0.0
        %514 = vmatpush1.msra.mxu0 0.0
        %515 = vmatprep.subr.mxu0 0.0
        %516 = vmatpush1.msra.mxu0 0.0
        %517 = vmatprep.subr.mxu0 0.0
        %518 = vmatpush1.msra.mxu0 0.0
        %519 = vmatprep.subr.mxu0 0.0
        %520 = vmatpush1.msra.mxu0 0.0
        %521 = vmatprep.subr.mxu0 0.0
        %522 = vmatpush1.msra.mxu0 0.0
        %523 = vmatprep.subr.mxu0 0.0
        %524 = vmatpush1.msra.mxu0 0.0
        %525 = vmatprep.subr.mxu0 0.0
        %526 = vmatpush1.msra.mxu0 0.0
        %527 = vmatprep.subr.mxu0 0.0
        %528 = vmatpush1.msra.mxu0 0.0
        %529 = vmatprep.subr.mxu0 0.0
        %530 = vmatpush1.msra.mxu0 0.0
        %531 = vmatprep.subr.mxu0 0.0
        %532 = vmatpush1.msra.mxu0 0.0
        %533 = vmatprep.subr.mxu0 0.0
        %534 = vmatpush1.msra.mxu0 0.0
        %535 = vmatprep.subr.mxu0 0.0
        %536 = vmatpush1.msra.mxu0 0.0
        %537 = vmatprep.subr.mxu0 0.0
        %538 = vmatpush1.msra.mxu0 0.0
        %539 = vmatprep.subr.mxu0 0.0
        %540 = vmatpush1.msra.mxu0 0.0
        %541 = vmatprep.subr.mxu0 0.0
        %542 = vmatpush1.msra.mxu0 0.0
        %543 = vmatprep.subr.mxu0 0.0
        %544 = vmatpush1.msra.mxu0 0.0
        %545 = vmatprep.subr.mxu0 0.0
        %546 = vmatpush1.msra.mxu0 0.0
        %547 = vmatprep.subr.mxu0 0.0
        %548 = vmatpush1.msra.mxu0 0.0
        %549 = vmatprep.subr.mxu0 0.0
        %550 = vmatpush1.msra.mxu0 0.0
        %551 = vmatprep.subr.mxu0 0.0
        %552 = vmatpush1.msra.mxu0 0.0
        %553 = vmatprep.subr.mxu0 0.0
        %554 = vmatpush1.msra.mxu0 0.0
        %555 = vmatprep.subr.mxu0 0.0
        %556 = vmatpush1.msra.mxu0 0.0
        %557 = vmatprep.subr.mxu0 0.0
        %558 = vmatpush1.msra.mxu0 0.0
        %559 = vmatprep.subr.mxu0 0.0
        %560 = vmatpush1.msra.mxu0 0.0
        %561 = vmatprep.subr.mxu0 0.0
        %562 = vmatpush1.msra.mxu0 0.0
        %563 = vmatprep.subr.mxu0 0.0
        %564 = vmatpush1.msra.mxu0 0.0
        %565 = vmatprep.subr.mxu0 0.0
        %566 = vmatpush1.msra.mxu0 0.0
        %567 = vmatprep.subr.mxu0 0.0
        %568 = vmatpush1.msra.mxu0 0.0
        %569 = vmatprep.subr.mxu0 0.0
        %570 = vmatpush1.msra.mxu0 0.0
        %571 = vmatprep.mubr.f32.mxu0 0.0
        %572 = vmatmul.mubr.f32.gmra.mrb[0].mxu0 %v486
        %v573 = vpop.f32.mrb[0].mxu0
        %v574 = vadd.f32 0.0, %v573
        %v575 = vpop.f32.mrb[0].mxu0
        %v576 = vadd.f32 0.0, %v575
        %577 = vmatprep.mubr.f32.mxu0 0.0
        %578 = vmatmul.mubr.f32.gmra.mrb[0].mxu0 %v489
        %v579 = vpop.f32.mrb[0].mxu0
        %v580 = vadd.f32 0.0, %v579
        %v581 = vpop.f32.mrb[0].mxu0
        %v582 = vadd.f32 0.0, %v581
        %583 = vmatprep.mubr.f32.mxu0 0.0
        %584 = vmatmul.mubr.f32.gmra.mrb[0].mxu0 %v492
        %v585 = vpop.f32.mrb[0].mxu0
        %v586 = vpop.f32.mrb[0].mxu0
        %v587 = vadd.f32 0.0, %v586
        %588 = vdwg.mxu0
        %589 = vmatprep.subr.mxu0 %v475
        %590 = vmatpush1.msra.mxu0 %v474
        %591 = vmatprep.subr.mxu0 %v479
        %592 = vmatpush1.msra.mxu0 %v478
        %593 = vmatprep.subr.mxu0 %v505
        %594 = vmatpush1.msra.mxu0 %v502
        %595 = vmatprep.subr.mxu0 0.0
        %596 = vmatpush1.msra.mxu0 0.0
        %597 = vmatprep.subr.mxu0 0.0
        %598 = vmatpush1.msra.mxu0 0.0
        %599 = vmatprep.subr.mxu0 0.0
        %600 = vmatpush1.msra.mxu0 0.0
        %601 = vmatprep.subr.mxu0 0.0
        %602 = vmatpush1.msra.mxu0 0.0
        %603 = vmatprep.subr.mxu0 0.0
        %604 = vmatpush1.msra.mxu0 0.0
        %605 = vmatprep.subr.mxu0 0.0
        %606 = vmatpush1.msra.mxu0 0.0
        %607 = vmatprep.subr.mxu0 0.0
        %608 = vmatpush1.msra.mxu0 0.0
        %609 = vmatprep.subr.mxu0 0.0
        %610 = vmatpush1.msra.mxu0 0.0
        %611 = vmatprep.subr.mxu0 0.0
        %612 = vmatpush1.msra.mxu0 0.0
        %613 = vmatprep.subr.mxu0 0.0
        %614 = vmatpush1.msra.mxu0 0.0
        %615 = vmatprep.subr.mxu0 0.0
        %616 = vmatpush1.msra.mxu0 0.0
        %617 = vmatprep.subr.mxu0 0.0
        %618 = vmatpush1.msra.mxu0 0.0
        %619 = vmatprep.subr.mxu0 0.0
        %620 = vmatpush1.msra.mxu0 0.0
        %621 = vmatprep.subr.mxu0 0.0
        %622 = vmatpush1.msra.mxu0 0.0
        %623 = vmatprep.subr.mxu0 0.0
        %624 = vmatpush1.msra.mxu0 0.0
        %625 = vmatprep.subr.mxu0 0.0
        %626 = vmatpush1.msra.mxu0 0.0
        %627 = vmatprep.subr.mxu0 0.0
        %628 = vmatpush1.msra.mxu0 0.0
        %629 = vmatprep.subr.mxu0 0.0
        %630 = vmatpush1.msra.mxu0 0.0
        %631 = vmatprep.subr.mxu0 0.0
        %632 = vmatpush1.msra.mxu0 0.0
        %633 = vmatprep.subr.mxu0 0.0
        %634 = vmatpush1.msra.mxu0 0.0
        %635 = vmatprep.subr.mxu0 0.0
        %636 = vmatpush1.msra.mxu0 0.0
        %637 = vmatprep.subr.mxu0 0.0
        %638 = vmatpush1.msra.mxu0 0.0
        %639 = vmatprep.subr.mxu0 0.0
        %640 = vmatpush1.msra.mxu0 0.0
        %641 = vmatprep.subr.mxu0 0.0
        %642 = vmatpush1.msra.mxu0 0.0
        %643 = vmatprep.subr.mxu0 0.0
        %644 = vmatpush1.msra.mxu0 0.0
        %645 = vmatprep.subr.mxu0 0.0
        %646 = vmatpush1.msra.mxu0 0.0
        %647 = vmatprep.subr.mxu0 0.0
        %648 = vmatpush1.msra.mxu0 0.0
        %649 = vmatprep.subr.mxu0 0.0
        %650 = vmatpush1.msra.mxu0 0.0
        %651 = vmatprep.subr.mxu0 0.0
        %652 = vmatpush1.msra.mxu0 0.0
        %653 = vmatprep.mubr.f32.mxu0 0.0
        %654 = vmatmul.mubr.f32.gmra.mrb[0].mxu0 %v486
        %v655 = vpop.f32.mrb[0].mxu0
        %v656 = vadd.f32 0.0, %v655
        %v657 = vpop.f32.mrb[0].mxu0
        %v658 = vadd.f32 0.0, %v657
        %659 = vmatprep.mubr.f32.mxu0 0.0
        %660 = vmatmul.mubr.f32.gmra.mrb[0].mxu0 %v489
        %v661 = vpop.f32.mrb[0].mxu0
        %v662 = vadd.f32 0.0, %v661
        %v663 = vpop.f32.mrb[0].mxu0
        %v664 = vadd.f32 0.0, %v663
        %665 = vmatprep.mubr.f32.mxu0 0.0
        %666 = vmatmul.mubr.f32.gmra.mrb[0].mxu0 %v492
        %v667 = vpop.f32.mrb[0].mxu0
        %v668 = vadd.f32 0.0, %v667
        %v669 = vpop.f32.mrb[0].mxu0
        %v670 = vadd.f32 0.0, %v669
        %671 = vdwg.mxu0
        %v673 = vsel %vm484, %v447, 0
        %v676 = vsel %vm484, %v448, 0
        %v679 = vsel %vm484, %v455, 0
        %v682 = vsel %vm494, %v467, 0
        %v685 = vsel %vm494, %v468, 0
        %v688 = vsel %vm494, %v469, 0
        %v691 = vsel %vm494, %v470, 0
        %693 = vmatprep.subr.mxu0 %v460
        %694 = vmatpush1.msra.mxu0 %v459
        %695 = vmatprep.subr.mxu0 %v464
        %696 = vmatpush1.msra.mxu0 %v463
        %697 = vmatprep.subr.mxu0 %v685
        %698 = vmatpush1.msra.mxu0 %v682
        %699 = vmatprep.subr.mxu0 0.0
        %700 = vmatpush1.msra.mxu0 0.0
        %701 = vmatprep.subr.mxu0 0.0
        %702 = vmatpush1.msra.mxu0 0.0
        %703 = vmatprep.subr.mxu0 0.0
        %704 = vmatpush1.msra.mxu0 0.0
        %705 = vmatprep.subr.mxu0 0.0
        %706 = vmatpush1.msra.mxu0 0.0
        %707 = vmatprep.subr.mxu0 0.0
        %708 = vmatpush1.msra.mxu0 0.0
        %709 = vmatprep.subr.mxu0 0.0
        %710 = vmatpush1.msra.mxu0 0.0
        %711 = vmatprep.subr.mxu0 0.0
        %712 = vmatpush1.msra.mxu0 0.0
        %713 = vmatprep.subr.mxu0 0.0
        %714 = vmatpush1.msra.mxu0 0.0
        %715 = vmatprep.subr.mxu0 0.0
        %716 = vmatpush1.msra.mxu0 0.0
        %717 = vmatprep.subr.mxu0 0.0
        %718 = vmatpush1.msra.mxu0 0.0
        %719 = vmatprep.subr.mxu0 0.0
        %720 = vmatpush1.msra.mxu0 0.0
        %721 = vmatprep.subr.mxu0 0.0
        %722 = vmatpush1.msra.mxu0 0.0
        %723 = vmatprep.subr.mxu0 0.0
        %724 = vmatpush1.msra.mxu0 0.0
        %725 = vmatprep.subr.mxu0 0.0
        %726 = vmatpush1.msra.mxu0 0.0
        %727 = vmatprep.subr.mxu0 0.0
        %728 = vmatpush1.msra.mxu0 0.0
        %729 = vmatprep.subr.mxu0 0.0
        %730 = vmatpush1.msra.mxu0 0.0
        %731 = vmatprep.subr.mxu0 0.0
        %732 = vmatpush1.msra.mxu0 0.0
        %733 = vmatprep.subr.mxu0 0.0
        %734 = vmatpush1.msra.mxu0 0.0
        %735 = vmatprep.subr.mxu0 0.0
        %736 = vmatpush1.msra.mxu0 0.0
        %737 = vmatprep.subr.mxu0 0.0
        %738 = vmatpush1.msra.mxu0 0.0
        %739 = vmatprep.subr.mxu0 0.0
        %740 = vmatpush1.msra.mxu0 0.0
        %741 = vmatprep.subr.mxu0 0.0
        %742 = vmatpush1.msra.mxu0 0.0
        %743 = vmatprep.subr.mxu0 0.0
        %744 = vmatpush1.msra.mxu0 0.0
        %745 = vmatprep.subr.mxu0 0.0
        %746 = vmatpush1.msra.mxu0 0.0
        %747 = vmatprep.subr.mxu0 0.0
        %748 = vmatpush1.msra.mxu0 0.0
        %749 = vmatprep.subr.mxu0 0.0
        %750 = vmatpush1.msra.mxu0 0.0
        %751 = vmatprep.subr.mxu0 0.0
        %752 = vmatpush1.msra.mxu0 0.0
        %753 = vmatprep.subr.mxu0 0.0
        %754 = vmatpush1.msra.mxu0 0.0
        %755 = vmatprep.subr.mxu0 0.0
        %756 = vmatpush1.msra.mxu0 0.0
        %757 = vmatprep.mubr.f32.mxu0 0.0
        %758 = vmatmul.mubr.f32.gmra.mrb[0].mxu0 %v673
        %v759 = vpop.f32.mrb[0].mxu0
        %v760 = vadd.f32 %v574, %v759
        %v761 = vpop.f32.mrb[0].mxu0
        %v762 = vadd.f32 %v576, %v761
        %763 = vmatprep.mubr.f32.mxu0 0.0
        %764 = vmatmul.mubr.f32.gmra.mrb[0].mxu0 %v676
        %v765 = vpop.f32.mrb[0].mxu0
        %v766 = vadd.f32 %v580, %v765
        %v767 = vpop.f32.mrb[0].mxu0
        %v768 = vadd.f32 %v582, %v767
        %769 = vmatprep.mubr.f32.mxu0 0.0
        %770 = vmatmul.mubr.f32.gmra.mrb[0].mxu0 %v679
        %v771 = vpop.f32.mrb[0].mxu0
        %v772 = vpop.f32.mrb[0].mxu0
        %v773 = vadd.f32 %v587, %v772
        %774 = vdwg.mxu0
        %775 = vmatprep.subr.mxu0 %v462
        %776 = vmatpush1.msra.mxu0 %v461
        %777 = vmatprep.subr.mxu0 %v466
        %778 = vmatpush1.msra.mxu0 %v465
        %779 = vmatprep.subr.mxu0 %v691
        %780 = vmatpush1.msra.mxu0 %v688
        %781 = vmatprep.subr.mxu0 0.0
        %782 = vmatpush1.msra.mxu0 0.0
        %783 = vmatprep.subr.mxu0 0.0
        %784 = vmatpush1.msra.mxu0 0.0
        %785 = vmatprep.subr.mxu0 0.0
        %786 = vmatpush1.msra.mxu0 0.0
        %787 = vmatprep.subr.mxu0 0.0
        %788 = vmatpush1.msra.mxu0 0.0
        %789 = vmatprep.subr.mxu0 0.0
        %790 = vmatpush1.msra.mxu0 0.0
        %791 = vmatprep.subr.mxu0 0.0
        %792 = vmatpush1.msra.mxu0 0.0
        %793 = vmatprep.subr.mxu0 0.0
        %794 = vmatpush1.msra.mxu0 0.0
        %795 = vmatprep.subr.mxu0 0.0
        %796 = vmatpush1.msra.mxu0 0.0
        %797 = vmatprep.subr.mxu0 0.0
        %798 = vmatpush1.msra.mxu0 0.0
        %799 = vmatprep.subr.mxu0 0.0
        %800 = vmatpush1.msra.mxu0 0.0
        %801 = vmatprep.subr.mxu0 0.0
        %802 = vmatpush1.msra.mxu0 0.0
        %803 = vmatprep.subr.mxu0 0.0
        %804 = vmatpush1.msra.mxu0 0.0
        %805 = vmatprep.subr.mxu0 0.0
        %806 = vmatpush1.msra.mxu0 0.0
        %807 = vmatprep.subr.mxu0 0.0
        %808 = vmatpush1.msra.mxu0 0.0
        %809 = vmatprep.subr.mxu0 0.0
        %810 = vmatpush1.msra.mxu0 0.0
        %811 = vmatprep.subr.mxu0 0.0
        %812 = vmatpush1.msra.mxu0 0.0
        %813 = vmatprep.subr.mxu0 0.0
        %814 = vmatpush1.msra.mxu0 0.0
        %815 = vmatprep.subr.mxu0 0.0
        %816 = vmatpush1.msra.mxu0 0.0
        %817 = vmatprep.subr.mxu0 0.0
        %818 = vmatpush1.msra.mxu0 0.0
        %819 = vmatprep.subr.mxu0 0.0
        %820 = vmatpush1.msra.mxu0 0.0
        %821 = vmatprep.subr.mxu0 0.0
        %822 = vmatpush1.msra.mxu0 0.0
        %823 = vmatprep.subr.mxu0 0.0
        %824 = vmatpush1.msra.mxu0 0.0
        %825 = vmatprep.subr.mxu0 0.0
        %826 = vmatpush1.msra.mxu0 0.0
        %827 = vmatprep.subr.mxu0 0.0
        %828 = vmatpush1.msra.mxu0 0.0
        %829 = vmatprep.subr.mxu0 0.0
        %830 = vmatpush1.msra.mxu0 0.0
        %831 = vmatprep.subr.mxu0 0.0
        %832 = vmatpush1.msra.mxu0 0.0
        %833 = vmatprep.subr.mxu0 0.0
        %834 = vmatpush1.msra.mxu0 0.0
        %835 = vmatprep.subr.mxu0 0.0
        %836 = vmatpush1.msra.mxu0 0.0
        %837 = vmatprep.subr.mxu0 0.0
        %838 = vmatpush1.msra.mxu0 0.0
        %839 = vmatprep.mubr.f32.mxu0 0.0
        %840 = vmatmul.mubr.f32.gmra.mrb[0].mxu0 %v673
        %v841 = vpop.f32.mrb[0].mxu0
        %v842 = vadd.f32 %v656, %v841
        %v843 = vpop.f32.mrb[0].mxu0
        %v844 = vadd.f32 %v658, %v843
        %845 = vmatprep.mubr.f32.mxu0 0.0
        %846 = vmatmul.mubr.f32.gmra.mrb[0].mxu0 %v676
        %v847 = vpop.f32.mrb[0].mxu0
        %v848 = vadd.f32 %v662, %v847
        %v849 = vpop.f32.mrb[0].mxu0
        %v850 = vadd.f32 %v664, %v849
        %851 = vmatprep.mubr.f32.mxu0 0.0
        %852 = vmatmul.mubr.f32.gmra.mrb[0].mxu0 %v679
        %v853 = vpop.f32.mrb[0].mxu0
        %v854 = vadd.f32 %v668, %v853
        %v855 = vpop.f32.mrb[0].mxu0
        %v856 = vadd.f32 %v670, %v855
        %857 = vdwg.mxu0
        %s858 = scalar_lea.vmem %s0, 192
        %v859 = vld [vmem:[%s858] sm:$0xff]
        %v860 = vld [vmem:[%s858 + $0x8] sm:$0xff]
        %v861 = vld [vmem:[%s858 + $0x10] sm:$0xff]
        %v862 = vld [vmem:[%s858 + $0x18] sm:$0xff]
        %v863 = vld [vmem:[%s858 + $0x20] sm:$0xff]
        %v864 = vld [vmem:[%s858 + $0x28] sm:$0xff]
        %v865 = vld [vmem:[%s858 + $0x30] sm:$0xff]
        %v866 = vld [vmem:[%s858 + $0x38] sm:$0xff]
        %v867 = vld [vmem:[%s858 + $0x40] sm:$0x3]
        %v868 = vld [vmem:[%s858 + $0x48] sm:$0x3]
        %v869 = vld [vmem:[%s858 + $0x50] sm:$0x3]
        %v870 = vld [vmem:[%s858 + $0x58] sm:$0x3]
        %v872 = vsel %vm484, %v451, 0
        %v875 = vsel %vm484, %v452, 0
        %v878 = vsel %vm484, %v457, 0
        %v881 = vsel %vm494, %v867, 0
        %v884 = vsel %vm494, %v868, 0
        %v887 = vsel %vm494, %v869, 0
        %v890 = vsel %vm494, %v870, 0
        %892 = vmatprep.subr.mxu0 %v860
        %893 = vmatpush1.msra.mxu0 %v859
        %894 = vmatprep.subr.mxu0 %v864
        %895 = vmatpush1.msra.mxu0 %v863
        %896 = vmatprep.subr.mxu0 %v884
        %897 = vmatpush1.msra.mxu0 %v881
        %898 = vmatprep.subr.mxu0 0.0
        %899 = vmatpush1.msra.mxu0 0.0
        %900 = vmatprep.subr.mxu0 0.0
        %901 = vmatpush1.msra.mxu0 0.0
        %902 = vmatprep.subr.mxu0 0.0
        %903 = vmatpush1.msra.mxu0 0.0
        %904 = vmatprep.subr.mxu0 0.0
        %905 = vmatpush1.msra.mxu0 0.0
        %906 = vmatprep.subr.mxu0 0.0
        %907 = vmatpush1.msra.mxu0 0.0
        %908 = vmatprep.subr.mxu0 0.0
        %909 = vmatpush1.msra.mxu0 0.0
        %910 = vmatprep.subr.mxu0 0.0
        %911 = vmatpush1.msra.mxu0 0.0
        %912 = vmatprep.subr.mxu0 0.0
        %913 = vmatpush1.msra.mxu0 0.0
        %914 = vmatprep.subr.mxu0 0.0
        %915 = vmatpush1.msra.mxu0 0.0
        %916 = vmatprep.subr.mxu0 0.0
        %917 = vmatpush1.msra.mxu0 0.0
        %918 = vmatprep.subr.mxu0 0.0
        %919 = vmatpush1.msra.mxu0 0.0
        %920 = vmatprep.subr.mxu0 0.0
        %921 = vmatpush1.msra.mxu0 0.0
        %922 = vmatprep.subr.mxu0 0.0
        %923 = vmatpush1.msra.mxu0 0.0
        %924 = vmatprep.subr.mxu0 0.0
        %925 = vmatpush1.msra.mxu0 0.0
        %926 = vmatprep.subr.mxu0 0.0
        %927 = vmatpush1.msra.mxu0 0.0
        %928 = vmatprep.subr.mxu0 0.0
        %929 = vmatpush1.msra.mxu0 0.0
        %930 = vmatprep.subr.mxu0 0.0
        %931 = vmatpush1.msra.mxu0 0.0
        %932 = vmatprep.subr.mxu0 0.0
        %933 = vmatpush1.msra.mxu0 0.0
        %934 = vmatprep.subr.mxu0 0.0
        %935 = vmatpush1.msra.mxu0 0.0
        %936 = vmatprep.subr.mxu0 0.0
        %937 = vmatpush1.msra.mxu0 0.0
        %938 = vmatprep.subr.mxu0 0.0
        %939 = vmatpush1.msra.mxu0 0.0
        %940 = vmatprep.subr.mxu0 0.0
        %941 = vmatpush1.msra.mxu0 0.0
        %942 = vmatprep.subr.mxu0 0.0
        %943 = vmatpush1.msra.mxu0 0.0
        %944 = vmatprep.subr.mxu0 0.0
        %945 = vmatpush1.msra.mxu0 0.0
        %946 = vmatprep.subr.mxu0 0.0
        %947 = vmatpush1.msra.mxu0 0.0
        %948 = vmatprep.subr.mxu0 0.0
        %949 = vmatpush1.msra.mxu0 0.0
        %950 = vmatprep.subr.mxu0 0.0
        %951 = vmatpush1.msra.mxu0 0.0
        %952 = vmatprep.subr.mxu0 0.0
        %953 = vmatpush1.msra.mxu0 0.0
        %954 = vmatprep.subr.mxu0 0.0
        %955 = vmatpush1.msra.mxu0 0.0
        %956 = vmatprep.mubr.f32.mxu0 0.0
        %957 = vmatmul.mubr.f32.gmra.mrb[0].mxu0 %v872
        %v958 = vpop.f32.mrb[0].mxu0
        %v959 = vadd.f32 0.0, %v958
        %v960 = vpop.f32.mrb[0].mxu0
        %v961 = vadd.f32 0.0, %v960
        %962 = vmatprep.mubr.f32.mxu0 0.0
        %963 = vmatmul.mubr.f32.gmra.mrb[0].mxu0 %v875
        %v964 = vpop.f32.mrb[0].mxu0
        %v965 = vadd.f32 0.0, %v964
        %v966 = vpop.f32.mrb[0].mxu0
        %v967 = vadd.f32 0.0, %v966
        %968 = vmatprep.mubr.f32.mxu0 0.0
        %969 = vmatmul.mubr.f32.gmra.mrb[0].mxu0 %v878
        %v970 = vpop.f32.mrb[0].mxu0
        %v971 = vpop.f32.mrb[0].mxu0
        %v972 = vadd.f32 0.0, %v971
        %973 = vdwg.mxu0
        %974 = vmatprep.subr.mxu0 %v862
        %975 = vmatpush1.msra.mxu0 %v861
        %976 = vmatprep.subr.mxu0 %v866
        %977 = vmatpush1.msra.mxu0 %v865
        %978 = vmatprep.subr.mxu0 %v890
        %979 = vmatpush1.msra.mxu0 %v887
        %980 = vmatprep.subr.mxu0 0.0
        %981 = vmatpush1.msra.mxu0 0.0
        %982 = vmatprep.subr.mxu0 0.0
        %983 = vmatpush1.msra.mxu0 0.0
        %984 = vmatprep.subr.mxu0 0.0
        %985 = vmatpush1.msra.mxu0 0.0
        %986 = vmatprep.subr.mxu0 0.0
        %987 = vmatpush1.msra.mxu0 0.0
        %988 = vmatprep.subr.mxu0 0.0
        %989 = vmatpush1.msra.mxu0 0.0
        %990 = vmatprep.subr.mxu0 0.0
        %991 = vmatpush1.msra.mxu0 0.0
        %992 = vmatprep.subr.mxu0 0.0
        %993 = vmatpush1.msra.mxu0 0.0
        %994 = vmatprep.subr.mxu0 0.0
        %995 = vmatpush1.msra.mxu0 0.0
        %996 = vmatprep.subr.mxu0 0.0
        %997 = vmatpush1.msra.mxu0 0.0
        %998 = vmatprep.subr.mxu0 0.0
        %999 = vmatpush1.msra.mxu0 0.0
        %1000 = vmatprep.subr.mxu0 0.0
        %1001 = vmatpush1.msra.mxu0 0.0
        %1002 = vmatprep.subr.mxu0 0.0
        %1003 = vmatpush1.msra.mxu0 0.0
        %1004 = vmatprep.subr.mxu0 0.0
        %1005 = vmatpush1.msra.mxu0 0.0
        %1006 = vmatprep.subr.mxu0 0.0
        %1007 = vmatpush1.msra.mxu0 0.0
        %1008 = vmatprep.subr.mxu0 0.0
        %1009 = vmatpush1.msra.mxu0 0.0
        %1010 = vmatprep.subr.mxu0 0.0
        %1011 = vmatpush1.msra.mxu0 0.0
        %1012 = vmatprep.subr.mxu0 0.0
        %1013 = vmatpush1.msra.mxu0 0.0
        %1014 = vmatprep.subr.mxu0 0.0
        %1015 = vmatpush1.msra.mxu0 0.0
        %1016 = vmatprep.subr.mxu0 0.0
        %1017 = vmatpush1.msra.mxu0 0.0
        %1018 = vmatprep.subr.mxu0 0.0
        %1019 = vmatpush1.msra.mxu0 0.0
        %1020 = vmatprep.subr.mxu0 0.0
        %1021 = vmatpush1.msra.mxu0 0.0
        %1022 = vmatprep.subr.mxu0 0.0
        %1023 = vmatpush1.msra.mxu0 0.0
        %1024 = vmatprep.subr.mxu0 0.0
        %1025 = vmatpush1.msra.mxu0 0.0
        %1026 = vmatprep.subr.mxu0 0.0
        %1027 = vmatpush1.msra.mxu0 0.0
        %1028 = vmatprep.subr.mxu0 0.0
        %1029 = vmatpush1.msra.mxu0 0.0
        %1030 = vmatprep.subr.mxu0 0.0
        %1031 = vmatpush1.msra.mxu0 0.0
        %1032 = vmatprep.subr.mxu0 0.0
        %1033 = vmatpush1.msra.mxu0 0.0
        %1034 = vmatprep.subr.mxu0 0.0
        %1035 = vmatpush1.msra.mxu0 0.0
        %1036 = vmatprep.subr.mxu0 0.0
        %1037 = vmatpush1.msra.mxu0 0.0
        %1038 = vmatprep.mubr.f32.mxu0 0.0
        %1039 = vmatmul.mubr.f32.gmra.mrb[0].mxu0 %v872
        %v1040 = vpop.f32.mrb[0].mxu0
        %v1041 = vadd.f32 0.0, %v1040
        %v1042 = vpop.f32.mrb[0].mxu0
        %v1043 = vadd.f32 0.0, %v1042
        %1044 = vmatprep.mubr.f32.mxu0 0.0
        %1045 = vmatmul.mubr.f32.gmra.mrb[0].mxu0 %v875
        %v1046 = vpop.f32.mrb[0].mxu0
        %v1047 = vadd.f32 0.0, %v1046
        %v1048 = vpop.f32.mrb[0].mxu0
        %v1049 = vadd.f32 0.0, %v1048
        %1050 = vmatprep.mubr.f32.mxu0 0.0
        %1051 = vmatmul.mubr.f32.gmra.mrb[0].mxu0 %v878
        %v1052 = vpop.f32.mrb[0].mxu0
        %v1053 = vadd.f32 0.0, %v1052
        %v1054 = vpop.f32.mrb[0].mxu0
        %v1055 = vadd.f32 0.0, %v1054
        %1056 = vdwg.mxu0
        %v1057 = vadd.f32 %v760, %v959
        %v1058 = vadd.f32 %v762, %v961
        %v1059 = vadd.f32 %v842, %v1041
        %v1060 = vadd.f32 %v844, %v1043
        %v1061 = vadd.f32 %v766, %v965
        %v1062 = vadd.f32 %v768, %v967
        %v1063 = vadd.f32 %v848, %v1047
        %v1064 = vadd.f32 %v850, %v1049
        %v1065 = vadd.f32 %v773, %v972
        %v1066 = vadd.f32 %v854, %v1053
        %v1067 = vadd.f32 %v856, %v1055
        %s1068 = scalar_lea.vmem %s0, 288
        %v1069 = vld [vmem:[%s1068] sm:$0xff]
        %v1070 = vld [vmem:[%s1068 + $0x8] sm:$0xff]
        %v1071 = vld [vmem:[%s1068 + $0x10] sm:$0xff]
        %v1072 = vld [vmem:[%s1068 + $0x18] sm:$0xff]
        %v1073 = vld [vmem:[%s1068 + $0x20] sm:$0xff]
        %v1074 = vld [vmem:[%s1068 + $0x28] sm:$0xff]
        %v1075 = vld [vmem:[%s1068 + $0x30] sm:$0xff]
        %v1076 = vld [vmem:[%s1068 + $0x38] sm:$0xff]
        %v1077 = vld [vmem:[%s1068 + $0x40] sm:$0x3]
        %v1078 = vld [vmem:[%s1068 + $0x48] sm:$0x3]
        %v1079 = vld [vmem:[%s1068 + $0x50] sm:$0x3]
        %v1080 = vld [vmem:[%s1068 + $0x58] sm:$0x3]
        %v1082 = vsel %vm484, %v453, 0
        %v1085 = vsel %vm484, %v454, 0
        %v1088 = vsel %vm484, %v458, 0
        %v1091 = vsel %vm494, %v1077, 0
        %v1094 = vsel %vm494, %v1078, 0
        %v1097 = vsel %vm494, %v1079, 0
        %v1100 = vsel %vm494, %v1080, 0
        %1102 = vmatprep.subr.mxu0 %v1070
        %1103 = vmatpush1.msra.mxu0 %v1069
        %1104 = vmatprep.subr.mxu0 %v1074
        %1105 = vmatpush1.msra.mxu0 %v1073
        %1106 = vmatprep.subr.mxu0 %v1094
        %1107 = vmatpush1.msra.mxu0 %v1091
        %1108 = vmatprep.subr.mxu0 0.0
        %1109 = vmatpush1.msra.mxu0 0.0
        %1110 = vmatprep.subr.mxu0 0.0
        %1111 = vmatpush1.msra.mxu0 0.0
        %1112 = vmatprep.subr.mxu0 0.0
        %1113 = vmatpush1.msra.mxu0 0.0
        %1114 = vmatprep.subr.mxu0 0.0
        %1115 = vmatpush1.msra.mxu0 0.0
        %1116 = vmatprep.subr.mxu0 0.0
        %1117 = vmatpush1.msra.mxu0 0.0
        %1118 = vmatprep.subr.mxu0 0.0
        %1119 = vmatpush1.msra.mxu0 0.0
        %1120 = vmatprep.subr.mxu0 0.0
        %1121 = vmatpush1.msra.mxu0 0.0
        %1122 = vmatprep.subr.mxu0 0.0
        %1123 = vmatpush1.msra.mxu0 0.0
        %1124 = vmatprep.subr.mxu0 0.0
        %1125 = vmatpush1.msra.mxu0 0.0
        %1126 = vmatprep.subr.mxu0 0.0
        %1127 = vmatpush1.msra.mxu0 0.0
        %1128 = vmatprep.subr.mxu0 0.0
        %1129 = vmatpush1.msra.mxu0 0.0
        %1130 = vmatprep.subr.mxu0 0.0
        %1131 = vmatpush1.msra.mxu0 0.0
        %1132 = vmatprep.subr.mxu0 0.0
        %1133 = vmatpush1.msra.mxu0 0.0
        %1134 = vmatprep.subr.mxu0 0.0
        %1135 = vmatpush1.msra.mxu0 0.0
        %1136 = vmatprep.subr.mxu0 0.0
        %1137 = vmatpush1.msra.mxu0 0.0
        %1138 = vmatprep.subr.mxu0 0.0
        %1139 = vmatpush1.msra.mxu0 0.0
        %1140 = vmatprep.subr.mxu0 0.0
        %1141 = vmatpush1.msra.mxu0 0.0
        %1142 = vmatprep.subr.mxu0 0.0
        %1143 = vmatpush1.msra.mxu0 0.0
        %1144 = vmatprep.subr.mxu0 0.0
        %1145 = vmatpush1.msra.mxu0 0.0
        %1146 = vmatprep.subr.mxu0 0.0
        %1147 = vmatpush1.msra.mxu0 0.0
        %1148 = vmatprep.subr.mxu0 0.0
        %1149 = vmatpush1.msra.mxu0 0.0
        %1150 = vmatprep.subr.mxu0 0.0
        %1151 = vmatpush1.msra.mxu0 0.0
        %1152 = vmatprep.subr.mxu0 0.0
        %1153 = vmatpush1.msra.mxu0 0.0
        %1154 = vmatprep.subr.mxu0 0.0
        %1155 = vmatpush1.msra.mxu0 0.0
        %1156 = vmatprep.subr.mxu0 0.0
        %1157 = vmatpush1.msra.mxu0 0.0
        %1158 = vmatprep.subr.mxu0 0.0
        %1159 = vmatpush1.msra.mxu0 0.0
        %1160 = vmatprep.subr.mxu0 0.0
        %1161 = vmatpush1.msra.mxu0 0.0
        %1162 = vmatprep.subr.mxu0 0.0
        %1163 = vmatpush1.msra.mxu0 0.0
        %1164 = vmatprep.subr.mxu0 0.0
        %1165 = vmatpush1.msra.mxu0 0.0
        %1166 = vmatprep.mubr.f32.mxu0 0.0
        %1167 = vmatmul.mubr.f32.gmra.mrb[0].mxu0 %v1082
        %v1168 = vpop.f32.mrb[0].mxu0
        %v1169 = vadd.f32 0.0, %v1168
        %v1170 = vpop.f32.mrb[0].mxu0
        %v1171 = vadd.f32 0.0, %v1170
        %1172 = vmatprep.mubr.f32.mxu0 0.0
        %1173 = vmatmul.mubr.f32.gmra.mrb[0].mxu0 %v1085
        %v1174 = vpop.f32.mrb[0].mxu0
        %v1175 = vadd.f32 0.0, %v1174
        %v1176 = vpop.f32.mrb[0].mxu0
        %v1177 = vadd.f32 0.0, %v1176
        %1178 = vmatprep.mubr.f32.mxu0 0.0
        %1179 = vmatmul.mubr.f32.gmra.mrb[0].mxu0 %v1088
        %v1180 = vpop.f32.mrb[0].mxu0
        %v1181 = vpop.f32.mrb[0].mxu0
        %v1182 = vadd.f32 0.0, %v1181
        %1183 = vdwg.mxu0
        %1184 = vmatprep.subr.mxu0 %v1072
        %1185 = vmatpush1.msra.mxu0 %v1071
        %1186 = vmatprep.subr.mxu0 %v1076
        %1187 = vmatpush1.msra.mxu0 %v1075
        %1188 = vmatprep.subr.mxu0 %v1100
        %1189 = vmatpush1.msra.mxu0 %v1097
        %1190 = vmatprep.subr.mxu0 0.0
        %1191 = vmatpush1.msra.mxu0 0.0
        %1192 = vmatprep.subr.mxu0 0.0
        %1193 = vmatpush1.msra.mxu0 0.0
        %1194 = vmatprep.subr.mxu0 0.0
        %1195 = vmatpush1.msra.mxu0 0.0
        %1196 = vmatprep.subr.mxu0 0.0
        %1197 = vmatpush1.msra.mxu0 0.0
        %1198 = vmatprep.subr.mxu0 0.0
        %1199 = vmatpush1.msra.mxu0 0.0
        %1200 = vmatprep.subr.mxu0 0.0
        %1201 = vmatpush1.msra.mxu0 0.0
        %1202 = vmatprep.subr.mxu0 0.0
        %1203 = vmatpush1.msra.mxu0 0.0
        %1204 = vmatprep.subr.mxu0 0.0
        %1205 = vmatpush1.msra.mxu0 0.0
        %1206 = vmatprep.subr.mxu0 0.0
        %1207 = vmatpush1.msra.mxu0 0.0
        %1208 = vmatprep.subr.mxu0 0.0
        %1209 = vmatpush1.msra.mxu0 0.0
        %1210 = vmatprep.subr.mxu0 0.0
        %1211 = vmatpush1.msra.mxu0 0.0
        %1212 = vmatprep.subr.mxu0 0.0
        %1213 = vmatpush1.msra.mxu0 0.0
        %1214 = vmatprep.subr.mxu0 0.0
        %1215 = vmatpush1.msra.mxu0 0.0
        %1216 = vmatprep.subr.mxu0 0.0
        %1217 = vmatpush1.msra.mxu0 0.0
        %1218 = vmatprep.subr.mxu0 0.0
        %1219 = vmatpush1.msra.mxu0 0.0
        %1220 = vmatprep.subr.mxu0 0.0
        %1221 = vmatpush1.msra.mxu0 0.0
        %1222 = vmatprep.subr.mxu0 0.0
        %1223 = vmatpush1.msra.mxu0 0.0
        %1224 = vmatprep.subr.mxu0 0.0
        %1225 = vmatpush1.msra.mxu0 0.0
        %1226 = vmatprep.subr.mxu0 0.0
        %1227 = vmatpush1.msra.mxu0 0.0
        %1228 = vmatprep.subr.mxu0 0.0
        %1229 = vmatpush1.msra.mxu0 0.0
        %1230 = vmatprep.subr.mxu0 0.0
        %1231 = vmatpush1.msra.mxu0 0.0
        %1232 = vmatprep.subr.mxu0 0.0
        %1233 = vmatpush1.msra.mxu0 0.0
        %1234 = vmatprep.subr.mxu0 0.0
        %1235 = vmatpush1.msra.mxu0 0.0
        %1236 = vmatprep.subr.mxu0 0.0
        %1237 = vmatpush1.msra.mxu0 0.0
        %1238 = vmatprep.subr.mxu0 0.0
        %1239 = vmatpush1.msra.mxu0 0.0
        %1240 = vmatprep.subr.mxu0 0.0
        %1241 = vmatpush1.msra.mxu0 0.0
        %1242 = vmatprep.subr.mxu0 0.0
        %1243 = vmatpush1.msra.mxu0 0.0
        %1244 = vmatprep.subr.mxu0 0.0
        %1245 = vmatpush1.msra.mxu0 0.0
        %1246 = vmatprep.subr.mxu0 0.0
        %1247 = vmatpush1.msra.mxu0 0.0
        %1248 = vmatprep.mubr.f32.mxu0 0.0
        %1249 = vmatmul.mubr.f32.gmra.mrb[0].mxu0 %v1082
        %v1250 = vpop.f32.mrb[0].mxu0
        %v1251 = vadd.f32 0.0, %v1250
        %v1252 = vpop.f32.mrb[0].mxu0
        %v1253 = vadd.f32 0.0, %v1252
        %1254 = vmatprep.mubr.f32.mxu0 0.0
        %1255 = vmatmul.mubr.f32.gmra.mrb[0].mxu0 %v1085
        %v1256 = vpop.f32.mrb[0].mxu0
        %v1257 = vadd.f32 0.0, %v1256
        %v1258 = vpop.f32.mrb[0].mxu0
        %v1259 = vadd.f32 0.0, %v1258
        %1260 = vmatprep.mubr.f32.mxu0 0.0
        %1261 = vmatmul.mubr.f32.gmra.mrb[0].mxu0 %v1088
        %v1262 = vpop.f32.mrb[0].mxu0
        %v1263 = vadd.f32 0.0, %v1262
        %v1264 = vpop.f32.mrb[0].mxu0
        %v1265 = vadd.f32 0.0, %v1264
        %1266 = vdwg.mxu0
        %v1267 = vadd.f32 %v1057, %v1169
        %v1268 = vadd.f32 %v1058, %v1171
        %v1269 = vadd.f32 %v1059, %v1251
        %v1270 = vadd.f32 %v1060, %v1253
        %v1271 = vadd.f32 %v1061, %v1175
        %v1272 = vadd.f32 %v1062, %v1177
        %v1273 = vadd.f32 %v1063, %v1257
        %v1274 = vadd.f32 %v1064, %v1259
        %v1275 = vadd.f32 %v1065, %v1182
        %v1276 = vadd.f32 %v1066, %v1263
        %v1277 = vadd.f32 %v1067, %v1265
        %v1278 = vld [vmem:[%s1] sm:$0x1]
        %vm1282 = vcmask 1046528
        %v1283 = vrot.slane %v1268, 1
        %v1284 = vrot.slane %v1272, 1
        %v1285 = vsel %vm1282, %v1283, %v1284
        %v1286 = vrot.slane %v1275, 1
        %v1287 = vsel %vm1282, %v1284, %v1286
        %v1290 = vadd.f32 %v1267, %v1285
        %v1291 = vadd.f32 %v1271, %v1287
        %v1293 = vlaneseq
        %v1294 = vshrl.u32 %v1293, 7
        %v1295 = vsub.s32 0, %v1294
        %v1296 = vrot.slane %v1278, %v1295
        %v1298 = vadd.f32 %v1290, %v1296
        %v1299 = vadd.f32 %v1291, %v1296
        %v1303 = vrot.slane %v1270, 1
        %v1304 = vrot.slane %v1274, 1
        %v1305 = vsel %vm1282, %v1303, %v1304
        %v1306 = vrot.slane %v1277, 1
        %v1307 = vsel %vm1282, %v1304, %v1306
        %v1311 = vadd.f32 %v1269, %v1305
        %v1312 = vadd.f32 %v1273, %v1307
        %v1313 = vadd.f32 %v1276, %v1306
        %v1314 = vadd.f32 %v1311, %v1296
        %v1315 = vadd.f32 %v1312, %v1296
        %v1316 = vadd.f32 %v1313, %v1296
        %v1320 = vrot.slane %v1314, 1
        %v1321 = vrot.slane %v1315, 1
        %v1322 = vsel %vm1282, %v1320, %v1321
        %v1323 = vrot.slane %v1316, 1
        %v1324 = vsel %vm1282, %v1321, %v1323
        %1325 = vrot.lane.b32.xlu0 %v1322, 32
        %v1326 = vpop.permute.xlu0 %1325
        %1327 = vrot.lane.b32.xlu0 %v1324, 32
        %v1328 = vpop.permute.xlu0 %1327
        %vm1331 = vcmask 261120
        %v1332 = vsel %vm1331, %v1298, %v1326
        %v1333 = vsel %vm1331, %v1299, %v1328
        %vm1334 = vcmask 523264
        %1335 = vst.msk [vmem:[%s438] sm:$0xff] %vm1334, %v1332
        %1336 = vst.msk [vmem:[%s438 + $0x8] sm:$0xff] %vm1334, %v1333
        %1339 = vrot.lane.b32.xlu0 %v1298, 96
        %v1340 = vpop.permute.xlu0 %1339
        %1341 = vrot.lane.b32.xlu0 %v1299, 96
        %v1342 = vpop.permute.xlu0 %1341
        %v1347 = vsel %vm1331, %v1340, %v1322
        %v1348 = vsel %vm1331, %v1342, %v1324
        %s1349 = scalar_lea.vmem %s438, 16 [#allocation4]
        %1350 = vst.msk [vmem:[%s1349] sm:$0xff] %vm1334, %v1347
        %1351 = vst.msk [vmem:[%s1349 + $0x8] sm:$0xff] %vm1334, %v1348
        %1352 = vrot.lane.b32.xlu0 %v1298, 64
        %v1353 = vpop.permute.xlu0 %1352
        %1354 = vrot.lane.b32.xlu0 %v1299, 64
        %v1355 = vpop.permute.xlu0 %1354
        %1358 = vrot.lane.b32.xlu0 %v1322, 96
        %v1359 = vpop.permute.xlu0 %1358
        %1360 = vrot.lane.b32.xlu0 %v1324, 96
        %v1361 = vpop.permute.xlu0 %1360
        %v1364 = vsel %vm1331, %v1353, %v1359
        %v1365 = vsel %vm1331, %v1355, %v1361
        %s1366 = scalar_lea.vmem %s438, 32 [#allocation4]
        %1367 = vst.msk [vmem:[%s1366] sm:$0xff] %vm1334, %v1364
        %1368 = vst.msk [vmem:[%s1366 + $0x8] sm:$0xff] %vm1334, %v1365
        %1369 = vrot.lane.b32.xlu0 %v1298, 32
        %v1370 = vpop.permute.xlu0 %1369
        %1371 = vrot.lane.b32.xlu0 %v1299, 32
        %v1372 = vpop.permute.xlu0 %1371
        %1375 = vrot.lane.b32.xlu0 %v1322, 64
        %v1376 = vpop.permute.xlu0 %1375
        %1377 = vrot.lane.b32.xlu0 %v1324, 64
        %v1378 = vpop.permute.xlu0 %1377
        %v1381 = vsel %vm1331, %v1370, %v1376
        %v1382 = vsel %vm1331, %v1372, %v1378
        %s1383 = scalar_lea.vmem %s438, 48 [#allocation4]
        %1384 = vst.msk [vmem:[%s1383] sm:$0xff] %vm1334, %v1381
        %1385 = vst.msk [vmem:[%s1383 + $0x8] sm:$0xff] %vm1334, %v1382
        %s1386 = sand.u32 %s142, 1
        %s1387 = scalar_lea.sflag [#allocation5], %s1386
        %s1388 = sand.u32 %s142, 1
        %s1389 = smul.addr %s1388, 64
        %s1390 = scalar_lea.vmem [#allocation4], %s1389
        // Predicated region
        $region127: #{tpu_custom_call.1} parent=117 // pred_check
          %p1391 = pneg %p152
        $region128: #{tpu_custom_call.1} parent=117 // pred_check_branch
          %1393 = sbr.rel (%p1391) target = $region130
        $region129: #{tpu_custom_call.1} parent=117 // pred_region
          %s1394 = smul.u32 2, %s23
          %s1396 = ssub.s32 1024, 1024
          %1397 = vsyncadd %s1387, %s1396
          %s1398 = smul.addr %s22, 8
          %s1399 = sadd.s32 %s1394, %s1398
          %s1400 = smul.addr %s1399, 128
          %s1401 = scalar_lea.hbm %s4, %s1400
          %s1402 = sshll.u32 %s1390, 4
          %s1403 = int_to_ptr.vmem [resolvable:$true] %s1402
          %1408 = dma.vmem_to_hbm [thread:$0]  %s1403, 1024, %s1401, %s1387, 128, 128, 8
        $region130: #{tpu_custom_call.1} parent=117 // pred_fallthru
          _
      $region118: #{tpu_custom_call.1} parent=5 // pred_fallthru
        _
      %p1409 = scmp.le.s32.totalorder 2, %s13
      // Predicated region
      $region131: #{tpu_custom_call.1} parent=5 // pred_check
        %p1410 = pneg %p1409
      $region132: #{tpu_custom_call.1} parent=5 // pred_check_branch
        %1412 = sbr.rel (%p1410) target = $region134
      $region133: #{tpu_custom_call.1} parent=5 // pred_region
        %s1413 = ssub.s32 %s13, 2
        // Predicated region
        $region135: #{tpu_custom_call.1} parent=133 // pred_check
          %p1414 = pneg %p158
        $region136: #{tpu_custom_call.1} parent=133 // pred_check_branch
          %1416 = sbr.rel (%p1414) target = $region138
        $region137: #{tpu_custom_call.1} parent=133 // pred_region
          %s1417 = sand.u32 %s143, 1
          %s1418 = scalar_lea.sflag [#allocation5], %s1417
          %s1419 = sand.u32 %s143, 1
          %s1420 = smul.addr %s1419, 64
          %s1421 = scalar_lea.vmem [#allocation4], %s1420
          %1422 = dma.done %s1418, 1024
        $region138: #{tpu_custom_call.1} parent=133 // pred_fallthru
          _
      $region134: #{tpu_custom_call.1} parent=5 // pred_fallthru
        _
    $region6: #{tpu_custom_call.1} parent=1 // loop_footer
      %s17 = sadd.s32 1, %s13
    $region7: #{tpu_custom_call.1} parent=1 // loop_footer_branch
      %12 = sbr.rel target = $region3
    $region8: #{tpu_custom_call.1} parent=1 // loop_exit
      _
    %1423 = vsyncpa [#allocation5], 1
    %s1424 = scalar_lea.sflag [#allocation5], 1
    %1425 = vsyncpa %s1424, 1

</llo_original>
